<compile_context>
chip_gen: v7x
topology: tpu7x:2x2x1
jax: 0.10.0
libtpu: 0.0.40
codegen_flags: <defaults>
</compile_context>

<pallas_src>
import functools

import jax
import jax.numpy as jnp
import numpy as np
from jax.experimental import pallas as pl
from jax.experimental.pallas import tpu as pltpu

_BN_EPS = 1e-5


# ------------------------------------------------------------------- in-kernel helpers


def _shifted(x, dh, dw, row, col, H, W):
    """y[c, i*W + j] = x[c, (i+dh)*W + (j+dw)], zeros outside the HxW plane.

    x is a flattened (C_tile, H*W) plane; the shift is one lane rotation (XLU,
    pltpu.roll) plus a single border mask (VPU select).  dh, dw in {-1, 0, +1}."""
    if dh == 0 and dw == 0:
        return x
    y = pltpu.roll(x, (-(dh * W + dw)) % (H * W), axis=1)
    m = None
    if dh == -1:
        m = row >= 1
    elif dh == 1:
        m = row <= H - 2
    if dw == -1:
        mc = col >= 1
        m = mc if m is None else m & mc
    elif dw == 1:
        mc = col <= W - 2
        m = mc if m is None else m & mc
    return jnp.where(m, y, 0.0)


def _dw3x3_s1(x, w_ref, row, col, H, W):
    """Depthwise 3x3 conv, stride 1, zero padding 1, on a flattened (C_tile, H*W) plane.
    w_ref block is (3, 3, C_tile, 1); w_ref[kh, kw] broadcasts along the lane axis."""
    acc = x * w_ref[1, 1]
    for kh in range(3):
        for kw in range(3):
            if kh == 1 and kw == 1:
                continue
            acc = acc + _shifted(x, kh - 1, kw - 1, row, col, H, W) * w_ref[kh, kw]
    return acc


def _prelu_bn(acc, scale, bias, alpha):
    y = acc * scale + bias                        # folded inference BatchNorm
    return jnp.where(y > 0.0, y, alpha * y)       # PReLU (per-channel alpha)


# ------------------------------------------------------------------------------ kernels


def _pool_kernel(Wo, rc_ref, x4_ref, w_ref, scale_ref, bias_ref, alpha_ref, o_ref):
    """pool_layer: depthwise 3x3 stride-2 conv + folded BN + PReLU.

    x4_ref holds the 4 spatial parity planes [ee, eo, oe, oo] of the input, each already
    flattened to (C_tile, Ho*Wo); only the Ho*Wo strided output positions are computed."""
    rc = rc_ref[...]
    ok_row = rc[0:1] >= 1
    ok_col = rc[1:2] >= 1
    xee, xeo, xoe, xoo = x4_ref[0, 0], x4_ref[0, 1], x4_ref[0, 2], x4_ref[0, 3]

    def left(v):          # v[i, j-1], zero at j == 0
        return jnp.where(ok_col, pltpu.roll(v, 1, axis=1), 0.0)

    def up(v):            # v[i-1, j], zero at i == 0
        return jnp.where(ok_row, pltpu.roll(v, Wo, axis=1), 0.0)

    def upleft(v):        # v[i-1, j-1]
        return jnp.where(ok_row & ok_col, pltpu.roll(v, Wo + 1, axis=1), 0.0)

    acc = (xee * w_ref[1, 1]
           + xeo * w_ref[1, 2] + left(xeo) * w_ref[1, 0]
           + xoe * w_ref[2, 1] + up(xoe) * w_ref[0, 1]
           + xoo * w_ref[2, 2] + left(xoo) * w_ref[2, 0]
           + up(xoo) * w_ref[0, 2] + upleft(xoo) * w_ref[0, 0])
    o_ref[0] = _prelu_bn(acc, scale_ref[...], bias_ref[...], alpha_ref[...])


def _cbr_gap_kernel(H, W, rc_ref, x_ref, w_ref, scale_ref, bias_ref, alpha_ref,
                    y_ref, gap_ref):
    """conv_channel: depthwise 3x3 stride-1 conv + folded BN + PReLU, with the global
    average pool fused in as a tiny second (C_tile, 1) output."""
    rc = rc_ref[...]
    y = _prelu_bn(_dw3x3_s1(x_ref[0], w_ref, rc[0:1], rc[1:2], H, W),
                  scale_ref[...], bias_ref[...], alpha_ref[...])
    y_ref[0] = y
    gap_ref[0] = jnp.sum(y, axis=1, keepdims=True) * (1.0 / (H * W))


def _proj_concat_kernel(H, W, rc_ref, x_ref, xp_ref, w_ref, scale_ref, bias_ref,
                        alpha_ref, o_ref):
    """proj_layer: depthwise 3x3 stride-1 conv + folded BN*gate + PReLU.  The sigmoid gate
    is pre-folded into scale/bias (exact since gate > 0).  Writes the gated projection into
    channel-half 1 of the final output and copies the pool output into half 0 (fused concat)."""
    rc = rc_ref[...]
    y = _prelu_bn(_dw3x3_s1(x_ref[0], w_ref, rc[0:1], rc[1:2], H, W),
                  scale_ref[0], bias_ref[0], alpha_ref[...])
    o_ref[0, 0] = xp_ref[0]
    o_ref[0, 1] = y


# ----------------------------------------------------------------------------- wrappers


def _channel_tile(C):
    # Depthwise conv: channels are independent, so tiling C bounds per-grid-step VMEM
    # (important on v7x: 64 MiB) with no halo logic.  At C=4 this is a single tile.
    # TODO(synk): also tile H (with a 1-row halo) for very large spatial planes.
    return C if C <= 128 else 128


_PARAMS = pltpu.CompilerParams(dimension_semantics=("parallel", "parallel"))


def pool_layer(x, w, scale, bias, alpha, rc):
    """Depthwise 3x3 stride-2 CBR.  x: (B, C, H, W) -> (B, C, (H//2)*(W//2)) flattened."""
    B, C, H, W = x.shape
    assert H % 2 == 0 and W % 2 == 0  # TODO(synk): odd spatial sizes need a padded parity split
    Ho, Wo = H // 2, W // 2
    HWo = Ho * Wo
    ct = _channel_tile(C)
    assert C % ct == 0
    # Single cheap relayout: deinterleave the 4 spatial parity planes.  Replaces the old
    # jnp.pad pass AND the 4x over-compute + strided post-subsample of the stride-1 form.
    x4 = x.reshape(B, C, Ho, 2, Wo, 2).transpose(0, 3, 5, 1, 2, 4).reshape(B, 4, C, HWo)
    return pl.pallas_call(
        functools.partial(_pool_kernel, Wo),
        out_shape=jax.ShapeDtypeStruct((B, C, HWo), jnp.float32),
        grid=(B, C // ct),
        in_specs=[
            pl.BlockSpec((2, HWo), lambda b, t: (0, 0)),
            pl.BlockSpec((1, 4, ct, HWo), lambda b, t: (b, 0, t, 0)),
            pl.BlockSpec((3, 3, ct, 1), lambda b, t: (0, 0, t, 0)),
            pl.BlockSpec((ct, 1), lambda b, t: (t, 0)),
            pl.BlockSpec((ct, 1), lambda b, t: (t, 0)),
            pl.BlockSpec((ct, 1), lambda b, t: (t, 0)),
        ],
        out_specs=pl.BlockSpec((1, ct, HWo), lambda b, t: (b, t, 0)),
        compiler_params=_PARAMS,
    )(rc, x4, w, scale, bias, alpha)


def conv_channel_gap(xp, w, scale, bias, alpha, rc, H, W):
    """Depthwise 3x3 stride-1 CBR with fused global-average-pool.  xp: (B, C, H*W)."""
    B, C, HW = xp.shape
    ct = _channel_tile(C)
    return pl.pallas_call(
        functools.partial(_cbr_gap_kernel, H, W),
        out_shape=(jax.ShapeDtypeStruct((B, C, HW), jnp.float32),
                   jax.ShapeDtypeStruct((B, C, 1), jnp.float32)),
        grid=(B, C // ct),
        in_specs=[
            pl.BlockSpec((2, HW), lambda b, t: (0, 0)),
            pl.BlockSpec((1, ct, HW), lambda b, t: (b, t, 0)),
            pl.BlockSpec((3, 3, ct, 1), lambda b, t: (0, 0, t, 0)),
            pl.BlockSpec((ct, 1), lambda b, t: (t, 0)),
            pl.BlockSpec((ct, 1), lambda b, t: (t, 0)),
            pl.BlockSpec((ct, 1), lambda b, t: (t, 0)),
        ],
        out_specs=(pl.BlockSpec((1, ct, HW), lambda b, t: (b, t, 0)),
                   pl.BlockSpec((1, ct, 1), lambda b, t: (b, t, 0))),
        compiler_params=_PARAMS,
    )(rc, xp, w, scale, bias, alpha)


def proj_concat(y1, xp, w, scale_g, bias_g, alpha, rc, H, W):
    """Gated depthwise 3x3 stride-1 CBR written into the second half of the final
    (B, 2, C, H*W) output; the pool output is copied into the first half (fused concat)."""
    B, C, HW = y1.shape
    ct = _channel_tile(C)
    return pl.pallas_call(
        functools.partial(_proj_concat_kernel, H, W),
        out_shape=jax.ShapeDtypeStruct((B, 2, C, HW), jnp.float32),
        grid=(B, C // ct),
        in_specs=[
            pl.BlockSpec((2, HW), lambda b, t: (0, 0)),
            pl.BlockSpec((1, ct, HW), lambda b, t: (b, t, 0)),
            pl.BlockSpec((1, ct, HW), lambda b, t: (b, t, 0)),
            pl.BlockSpec((3, 3, ct, 1), lambda b, t: (0, 0, t, 0)),
            pl.BlockSpec((1, ct, 1), lambda b, t: (b, t, 0)),
            pl.BlockSpec((1, ct, 1), lambda b, t: (b, t, 0)),
            pl.BlockSpec((ct, 1), lambda b, t: (t, 0)),
        ],
        out_specs=pl.BlockSpec((1, 2, ct, HW), lambda b, t: (b, 0, t, 0)),
        compiler_params=_PARAMS,
    )(rc, y1, xp, w, scale_g, bias_g, alpha)


def strided_eff_dwise(x_nchw, p):
    """Forward pass of StridedEffDWise. Input NCHW (B,C,H,W); output NCHW (B,2C,H/2,W/2)."""
    x = x_nchw.astype(jnp.float32)
    B, C, H, W = x.shape
    Ho, Wo = H // 2, W // 2

    # Static (row, col) indices of the flattened Ho x Wo plane, shared by all three kernels
    # (used for the zero-padding border masks of the rolled taps).
    rc = jnp.asarray(np.stack([np.repeat(np.arange(Ho), Wo),
                               np.tile(np.arange(Wo), Ho)]).astype(np.int32))

    def w4(w):   # (3, 3, C) -> (3, 3, C, 1): each tap is a per-channel sublane scalar
        return w.reshape(3, 3, C, 1)

    def c1(v):   # (C,) -> (C, 1)
        return v.reshape(C, 1)

    # pool_layer: depthwise 3x3 stride-2 CBR (only Ho*Wo positions are ever computed)
    xp = pool_layer(x, w4(p["pool_w"]), c1(p["pool_scale"]), c1(p["pool_bias"]),
                    c1(p["pool_alpha"]), rc)
    # dw_layer.conv_channel: depthwise 3x3 stride-1 CBR with the global-average-pool fused in
    y1, gap = conv_channel_gap(xp, w4(p["cc_w"]), c1(p["cc_scale"]), c1(p["cc_bias"]),
                               c1(p["cc_alpha"]), rc, Ho, Wo)
    # dw_layer.linear_comb_layer: (B,C)@(C,C) + sigmoid is far too small for the MXU ->
    # plain JAX, then folded into the proj BN scale/bias (exact: gate in (0,1)).
    gate = jax.nn.sigmoid(gap.reshape(B, C) @ p["se_w"])
    scale_g = (p["proj_scale"][None, :] * gate).reshape(B, C, 1)
    bias_g = (p["proj_bias"][None, :] * gate).reshape(B, C, 1)
    # dw_layer.proj_layer (gate folded) + fused channel concat with the pool output
    out = proj_concat(y1, xp, w4(p["proj_w"]), scale_g, bias_g, c1(p["proj_alpha"]),
                      rc, Ho, Wo)
    return out.reshape(B, 2 * C, Ho, Wo)   # free reshape: (B,2,C,Ho*Wo) is already NCHW order


# ---------------------------------------------------------------------------- reference


def _reference(x_nchw, p):
    x = jnp.transpose(x_nchw, (0, 2, 3, 1)).astype(jnp.float32)

    def dwconv(x, w, stride):
        k = w[:, :, None, :]                                      # HWIO, I=1, O=C
        return jax.lax.conv_general_dilated(
            x, k, (stride, stride), ((1, 1), (1, 1)),
            dimension_numbers=("NHWC", "HWIO", "NHWC"),
            feature_group_count=x.shape[-1])

    def cbr(x, w, scale, bias, alpha, stride):
        y = dwconv(x, w, stride) * scale + bias
        return jnp.where(y > 0, y, alpha * y)

    xp = cbr(x, p["pool_w"], p["pool_scale"], p["pool_bias"], p["pool_alpha"], 2)
    y1 = cbr(xp, p["cc_w"], p["cc_scale"], p["cc_bias"], p["cc_alpha"], 1)
    gate = jax.nn.sigmoid(jnp.mean(y1, axis=(1, 2)) @ p["se_w"])[:, None, None, :]
    proj = cbr(y1, p["proj_w"], p["proj_scale"], p["proj_bias"], p["proj_alpha"], 1)
    out = jnp.concatenate([xp, proj * gate], axis=-1)
    return jnp.transpose(out, (0, 3, 1, 2))


# ------------------------------------------------------------------------ params / main


def make_params(key, C):
    """Deterministic synthetic parameters; BN folded into per-channel scale/bias."""
    ks = iter(jax.random.split(key, 32))
    params = {}
    for name in ("pool", "cc", "proj"):
        w = jax.random.normal(next(ks), (3, 3, C), jnp.float32) * 0.3
        gamma = jax.random.uniform(next(ks), (C,), jnp.float32, 0.8, 1.2)
        beta = jax.random.normal(next(ks), (C,), jnp.float32) * 0.1
        mean = jax.random.normal(next(ks), (C,), jnp.float32) * 0.1
        var = jax.random.uniform(next(ks), (C,), jnp.float32, 0.5, 1.5)
        alpha = jax.random.uniform(next(ks), (C,), jnp.float32, 0.1, 0.4)  # PReLU slope
        scale = gamma / jnp.sqrt(var + _BN_EPS)
        bias = beta - mean * scale
        params[f"{name}_w"] = w
        params[f"{name}_scale"] = scale
        params[f"{name}_bias"] = bias
        params[f"{name}_alpha"] = alpha
    # 1x1 conv weight, stored transposed: se_w[ci, co] == torch_weight[co, ci, 0, 0]
    params["se_w"] = jax.random.normal(next(ks), (C, C), jnp.float32) * 0.3
    return params


if __name__ == "__main__":
    B, C, H, W = 2, 4, 16, 16
    key = jax.random.PRNGKey(0)
    kx, kp = jax.random.split(key)
    x = jax.random.normal(kx, (B, C, H, W), jnp.float32)
    params = make_params(kp, C)

    out = jax.jit(strided_eff_dwise)(x, params)
    out = jax.block_until_ready(out)
    assert out.shape == (B, 2 * C, H // 2, W // 2), out.shape

    ref = jax.block_until_ready(_reference(x, params))
    np.testing.assert_allclose(np.asarray(out), np.asarray(ref), rtol=1e-4, atol=1e-4)

    print("KERNEL_OK")
</pallas_src>

<mosaic_0001>
module attributes {stable_mosaic.version = 11 : i64} {
  func.func @_pool_kernel(%arg0: i32, %arg1: i32, %arg2: memref<2x64xi32, #tpu.memory_space<vmem>>, %arg3: memref<1x4x4x64xf32, #tpu.memory_space<vmem>>, %arg4: memref<3x3x4x1xf32, #tpu.memory_space<vmem>>, %arg5: memref<4x1xf32, #tpu.memory_space<vmem>>, %arg6: memref<4x1xf32, #tpu.memory_space<vmem>>, %arg7: memref<4x1xf32, #tpu.memory_space<vmem>>, %arg8: memref<1x4x64xf32, #tpu.memory_space<vmem>>) attributes {dimension_semantics = [#tpu.dimension_semantics<parallel>, #tpu.dimension_semantics<parallel>], iteration_bounds = array<i64: 2, 1>, scalar_prefetch = 0 : i64, scratch_operands = 0 : i64, tpu.core_type = #tpu.core_type<tc>, window_params = [{pipeline_mode = #tpu.pipeline_mode<synchronous>, transform_indices = @transform_0, window_bounds = array<i64: 2, 64>}, {transform_indices = @transform_1, window_bounds = array<i64: 1, 4, 4, 64>}, {transform_indices = @transform_2, window_bounds = array<i64: 3, 3, 4, 1>}, {transform_indices = @transform_3, window_bounds = array<i64: 4, 1>}, {transform_indices = @transform_4, window_bounds = array<i64: 4, 1>}, {transform_indices = @transform_5, window_bounds = array<i64: 4, 1>}, {transform_indices = @transform_6, window_bounds = array<i64: 1, 4, 64>}]} {
    %c0 = arith.constant 0 : index
    %c0_0 = arith.constant 0 : index
    %0 = vector.load %arg2[%c0, %c0_0] : memref<2x64xi32, #tpu.memory_space<vmem>>, vector<2x64xi32>
    %1 = vector.extract_strided_slice %0 {offsets = [0, 0], sizes = [1, 64], strides = [1, 1]} : vector<2x64xi32> to vector<1x64xi32>
    %c1_i32 = arith.constant 1 : i32
    %2 = vector.broadcast %c1_i32 : i32 to vector<1x64xi32>
    %3 = arith.cmpi sge, %1, %2 : vector<1x64xi32>
    %4 = vector.extract_strided_slice %0 {offsets = [1, 0], sizes = [1, 64], strides = [1, 1]} : vector<2x64xi32> to vector<1x64xi32>
    %c1_i32_1 = arith.constant 1 : i32
    %5 = vector.broadcast %c1_i32_1 : i32 to vector<1x64xi32>
    %6 = arith.cmpi sge, %4, %5 : vector<1x64xi32>
    %c0_2 = arith.constant 0 : index
    %c0_3 = arith.constant 0 : index
    %c0_4 = arith.constant 0 : index
    %c0_5 = arith.constant 0 : index
    %7 = vector.load %arg3[%c0_2, %c0_3, %c0_4, %c0_5] : memref<1x4x4x64xf32, #tpu.memory_space<vmem>>, vector<1x1x4x64xf32>
    %8 = vector.shape_cast %7 : vector<1x1x4x64xf32> to vector<4x64xf32>
    %c0_6 = arith.constant 0 : index
    %c1 = arith.constant 1 : index
    %c0_7 = arith.constant 0 : index
    %c0_8 = arith.constant 0 : index
    %9 = vector.load %arg3[%c0_6, %c1, %c0_7, %c0_8] : memref<1x4x4x64xf32, #tpu.memory_space<vmem>>, vector<1x1x4x64xf32>
    %10 = vector.shape_cast %9 : vector<1x1x4x64xf32> to vector<4x64xf32>
    %c0_9 = arith.constant 0 : index
    %c2 = arith.constant 2 : index
    %c0_10 = arith.constant 0 : index
    %c0_11 = arith.constant 0 : index
    %11 = vector.load %arg3[%c0_9, %c2, %c0_10, %c0_11] : memref<1x4x4x64xf32, #tpu.memory_space<vmem>>, vector<1x1x4x64xf32>
    %12 = vector.shape_cast %11 : vector<1x1x4x64xf32> to vector<4x64xf32>
    %c0_12 = arith.constant 0 : index
    %c3 = arith.constant 3 : index
    %c0_13 = arith.constant 0 : index
    %c0_14 = arith.constant 0 : index
    %13 = vector.load %arg3[%c0_12, %c3, %c0_13, %c0_14] : memref<1x4x4x64xf32, #tpu.memory_space<vmem>>, vector<1x1x4x64xf32>
    %14 = vector.shape_cast %13 : vector<1x1x4x64xf32> to vector<4x64xf32>
    %c1_15 = arith.constant 1 : index
    %c1_16 = arith.constant 1 : index
    %c0_17 = arith.constant 0 : index
    %c0_18 = arith.constant 0 : index
    %15 = vector.load %arg4[%c1_15, %c1_16, %c0_17, %c0_18] : memref<3x3x4x1xf32, #tpu.memory_space<vmem>>, vector<1x1x4x1xf32>
    %16 = vector.shape_cast %15 : vector<1x1x4x1xf32> to vector<4x1xf32>
    %17 = vector.broadcast %16 : vector<4x1xf32> to vector<4x64xf32>
    %18 = arith.mulf %8, %17 : vector<4x64xf32>
    %c1_19 = arith.constant 1 : index
    %c2_20 = arith.constant 2 : index
    %c0_21 = arith.constant 0 : index
    %c0_22 = arith.constant 0 : index
    %19 = vector.load %arg4[%c1_19, %c2_20, %c0_21, %c0_22] : memref<3x3x4x1xf32, #tpu.memory_space<vmem>>, vector<1x1x4x1xf32>
    %20 = vector.shape_cast %19 : vector<1x1x4x1xf32> to vector<4x1xf32>
    %21 = vector.broadcast %20 : vector<4x1xf32> to vector<4x64xf32>
    %22 = arith.mulf %10, %21 : vector<4x64xf32>
    %23 = arith.addf %18, %22 : vector<4x64xf32>
    %c1_i32_23 = arith.constant 1 : i32
    %24 = tpu.dynamic_rotate %10 by %c1_i32_23 dim 1 : vector<4x64xf32>, i32 -> vector<4x64xf32>
    %cst = arith.constant 0.000000e+00 : f32
    %25 = vector.shape_cast %6 : vector<1x64xi1> to vector<1x64xi1>
    %26 = vector.broadcast %25 : vector<1x64xi1> to vector<4x64xi1>
    %27 = vector.broadcast %cst : f32 to vector<4x64xf32>
    %28 = arith.select %26, %24, %27 : vector<4x64xi1>, vector<4x64xf32>
    %c1_24 = arith.constant 1 : index
    %c0_25 = arith.constant 0 : index
    %c0_26 = arith.constant 0 : index
    %c0_27 = arith.constant 0 : index
    %29 = vector.load %arg4[%c1_24, %c0_25, %c0_26, %c0_27] : memref<3x3x4x1xf32, #tpu.memory_space<vmem>>, vector<1x1x4x1xf32>
    %30 = vector.shape_cast %29 : vector<1x1x4x1xf32> to vector<4x1xf32>
    %31 = vector.broadcast %30 : vector<4x1xf32> to vector<4x64xf32>
    %32 = arith.mulf %28, %31 : vector<4x64xf32>
    %33 = arith.addf %23, %32 : vector<4x64xf32>
    %c2_28 = arith.constant 2 : index
    %c1_29 = arith.constant 1 : index
    %c0_30 = arith.constant 0 : index
    %c0_31 = arith.constant 0 : index
    %34 = vector.load %arg4[%c2_28, %c1_29, %c0_30, %c0_31] : memref<3x3x4x1xf32, #tpu.memory_space<vmem>>, vector<1x1x4x1xf32>
    %35 = vector.shape_cast %34 : vector<1x1x4x1xf32> to vector<4x1xf32>
    %36 = vector.broadcast %35 : vector<4x1xf32> to vector<4x64xf32>
    %37 = arith.mulf %12, %36 : vector<4x64xf32>
    %38 = arith.addf %33, %37 : vector<4x64xf32>
    %c8_i32 = arith.constant 8 : i32
    %39 = tpu.dynamic_rotate %12 by %c8_i32 dim 1 : vector<4x64xf32>, i32 -> vector<4x64xf32>
    %cst_32 = arith.constant 0.000000e+00 : f32
    %40 = vector.shape_cast %3 : vector<1x64xi1> to vector<1x64xi1>
    %41 = vector.broadcast %40 : vector<1x64xi1> to vector<4x64xi1>
    %42 = vector.broadcast %cst_32 : f32 to vector<4x64xf32>
    %43 = arith.select %41, %39, %42 : vector<4x64xi1>, vector<4x64xf32>
    %c0_33 = arith.constant 0 : index
    %c1_34 = arith.constant 1 : index
    %c0_35 = arith.constant 0 : index
    %c0_36 = arith.constant 0 : index
    %44 = vector.load %arg4[%c0_33, %c1_34, %c0_35, %c0_36] : memref<3x3x4x1xf32, #tpu.memory_space<vmem>>, vector<1x1x4x1xf32>
    %45 = vector.shape_cast %44 : vector<1x1x4x1xf32> to vector<4x1xf32>
    %46 = vector.broadcast %45 : vector<4x1xf32> to vector<4x64xf32>
    %47 = arith.mulf %43, %46 : vector<4x64xf32>
    %48 = arith.addf %38, %47 : vector<4x64xf32>
    %c2_37 = arith.constant 2 : index
    %c2_38 = arith.constant 2 : index
    %c0_39 = arith.constant 0 : index
    %c0_40 = arith.constant 0 : index
    %49 = vector.load %arg4[%c2_37, %c2_38, %c0_39, %c0_40] : memref<3x3x4x1xf32, #tpu.memory_space<vmem>>, vector<1x1x4x1xf32>
    %50 = vector.shape_cast %49 : vector<1x1x4x1xf32> to vector<4x1xf32>
    %51 = vector.broadcast %50 : vector<4x1xf32> to vector<4x64xf32>
    %52 = arith.mulf %14, %51 : vector<4x64xf32>
    %53 = arith.addf %48, %52 : vector<4x64xf32>
    %c1_i32_41 = arith.constant 1 : i32
    %54 = tpu.dynamic_rotate %14 by %c1_i32_41 dim 1 : vector<4x64xf32>, i32 -> vector<4x64xf32>
    %cst_42 = arith.constant 0.000000e+00 : f32
    %55 = vector.shape_cast %6 : vector<1x64xi1> to vector<1x64xi1>
    %56 = vector.broadcast %55 : vector<1x64xi1> to vector<4x64xi1>
    %57 = vector.broadcast %cst_42 : f32 to vector<4x64xf32>
    %58 = arith.select %56, %54, %57 : vector<4x64xi1>, vector<4x64xf32>
    %c2_43 = arith.constant 2 : index
    %c0_44 = arith.constant 0 : index
    %c0_45 = arith.constant 0 : index
    %c0_46 = arith.constant 0 : index
    %59 = vector.load %arg4[%c2_43, %c0_44, %c0_45, %c0_46] : memref<3x3x4x1xf32, #tpu.memory_space<vmem>>, vector<1x1x4x1xf32>
    %60 = vector.shape_cast %59 : vector<1x1x4x1xf32> to vector<4x1xf32>
    %61 = vector.broadcast %60 : vector<4x1xf32> to vector<4x64xf32>
    %62 = arith.mulf %58, %61 : vector<4x64xf32>
    %63 = arith.addf %53, %62 : vector<4x64xf32>
    %c8_i32_47 = arith.constant 8 : i32
    %64 = tpu.dynamic_rotate %14 by %c8_i32_47 dim 1 : vector<4x64xf32>, i32 -> vector<4x64xf32>
    %cst_48 = arith.constant 0.000000e+00 : f32
    %65 = vector.shape_cast %3 : vector<1x64xi1> to vector<1x64xi1>
    %66 = vector.broadcast %65 : vector<1x64xi1> to vector<4x64xi1>
    %67 = vector.broadcast %cst_48 : f32 to vector<4x64xf32>
    %68 = arith.select %66, %64, %67 : vector<4x64xi1>, vector<4x64xf32>
    %c0_49 = arith.constant 0 : index
    %c2_50 = arith.constant 2 : index
    %c0_51 = arith.constant 0 : index
    %c0_52 = arith.constant 0 : index
    %69 = vector.load %arg4[%c0_49, %c2_50, %c0_51, %c0_52] : memref<3x3x4x1xf32, #tpu.memory_space<vmem>>, vector<1x1x4x1xf32>
    %70 = vector.shape_cast %69 : vector<1x1x4x1xf32> to vector<4x1xf32>
    %71 = vector.broadcast %70 : vector<4x1xf32> to vector<4x64xf32>
    %72 = arith.mulf %68, %71 : vector<4x64xf32>
    %73 = arith.addf %63, %72 : vector<4x64xf32>
    %74 = arith.andi %3, %6 : vector<1x64xi1>
    %c9_i32 = arith.constant 9 : i32
    %75 = tpu.dynamic_rotate %14 by %c9_i32 dim 1 : vector<4x64xf32>, i32 -> vector<4x64xf32>
    %cst_53 = arith.constant 0.000000e+00 : f32
    %76 = vector.shape_cast %74 : vector<1x64xi1> to vector<1x64xi1>
    %77 = vector.broadcast %76 : vector<1x64xi1> to vector<4x64xi1>
    %78 = vector.broadcast %cst_53 : f32 to vector<4x64xf32>
    %79 = arith.select %77, %75, %78 : vector<4x64xi1>, vector<4x64xf32>
    %c0_54 = arith.constant 0 : index
    %c0_55 = arith.constant 0 : index
    %c0_56 = arith.constant 0 : index
    %c0_57 = arith.constant 0 : index
    %80 = vector.load %arg4[%c0_54, %c0_55, %c0_56, %c0_57] : memref<3x3x4x1xf32, #tpu.memory_space<vmem>>, vector<1x1x4x1xf32>
    %81 = vector.shape_cast %80 : vector<1x1x4x1xf32> to vector<4x1xf32>
    %82 = vector.broadcast %81 : vector<4x1xf32> to vector<4x64xf32>
    %83 = arith.mulf %79, %82 : vector<4x64xf32>
    %84 = arith.addf %73, %83 : vector<4x64xf32>
    %c0_58 = arith.constant 0 : index
    %c0_59 = arith.constant 0 : index
    %85 = vector.load %arg5[%c0_58, %c0_59] : memref<4x1xf32, #tpu.memory_space<vmem>>, vector<4x1xf32>
    %c0_60 = arith.constant 0 : index
    %c0_61 = arith.constant 0 : index
    %86 = vector.load %arg6[%c0_60, %c0_61] : memref<4x1xf32, #tpu.memory_space<vmem>>, vector<4x1xf32>
    %c0_62 = arith.constant 0 : index
    %c0_63 = arith.constant 0 : index
    %87 = vector.load %arg7[%c0_62, %c0_63] : memref<4x1xf32, #tpu.memory_space<vmem>>, vector<4x1xf32>
    %88 = vector.broadcast %85 : vector<4x1xf32> to vector<4x64xf32>
    %89 = arith.mulf %84, %88 : vector<4x64xf32>
    %90 = vector.broadcast %86 : vector<4x1xf32> to vector<4x64xf32>
    %91 = arith.addf %89, %90 : vector<4x64xf32>
    %cst_64 = arith.constant 0.000000e+00 : f32
    %92 = vector.broadcast %cst_64 : f32 to vector<4x64xf32>
    %93 = arith.cmpf ogt, %91, %92 : vector<4x64xf32>
    %94 = vector.broadcast %87 : vector<4x1xf32> to vector<4x64xf32>
    %95 = arith.mulf %94, %91 : vector<4x64xf32>
    %96 = arith.select %93, %91, %95 : vector<4x64xi1>, vector<4x64xf32>
    %c0_65 = arith.constant 0 : index
    %c0_66 = arith.constant 0 : index
    %c0_67 = arith.constant 0 : index
    %97 = vector.load %arg8[%c0_65, %c0_66, %c0_67] : memref<1x4x64xf32, #tpu.memory_space<vmem>>, vector<1x4x64xf32>
    %98 = vector.shape_cast %97 : vector<1x4x64xf32> to vector<4x64xf32>
    %99 = vector.shape_cast %96 : vector<4x64xf32> to vector<1x4x64xf32>
    tpu.vector_store %arg8[%c0_65, %c0_66, %c0_67], %99 {strides = array<i32>} : memref<1x4x64xf32, #tpu.memory_space<vmem>>, vector<1x4x64xf32>,
    return
  }
  func.func @transform_0(%arg0: i32, %arg1: i32) -> (i32, i32) {
    %c0_i32 = arith.constant 0 : i32
    %c0_i32_0 = arith.constant 0 : i32
    %c0_i32_1 = arith.constant 0 : i32
    return %c0_i32, %c0_i32_0 : i32, i32
  }
  func.func @transform_1(%arg0: i32, %arg1: i32) -> (i32, i32, i32, i32) {
    %c0_i32 = arith.constant 0 : i32
    %c0_i32_0 = arith.constant 0 : i32
    %c0_i32_1 = arith.constant 0 : i32
    return %arg0, %c0_i32, %arg1, %c0_i32_0 : i32, i32, i32, i32
  }
  func.func @transform_2(%arg0: i32, %arg1: i32) -> (i32, i32, i32, i32) {
    %c0_i32 = arith.constant 0 : i32
    %c0_i32_0 = arith.constant 0 : i32
    %c0_i32_1 = arith.constant 0 : i32
    %c0_i32_2 = arith.constant 0 : i32
    return %c0_i32, %c0_i32_0, %arg1, %c0_i32_1 : i32, i32, i32, i32
  }
  func.func @transform_3(%arg0: i32, %arg1: i32) -> (i32, i32) {
    %c0_i32 = arith.constant 0 : i32
    %c0_i32_0 = arith.constant 0 : i32
    return %arg1, %c0_i32 : i32, i32
  }
  func.func @transform_4(%arg0: i32, %arg1: i32) -> (i32, i32) {
    %c0_i32 = arith.constant 0 : i32
    %c0_i32_0 = arith.constant 0 : i32
    return %arg1, %c0_i32 : i32, i32
  }
  func.func @transform_5(%arg0: i32, %arg1: i32) -> (i32, i32) {
    %c0_i32 = arith.constant 0 : i32
    %c0_i32_0 = arith.constant 0 : i32
    return %arg1, %c0_i32 : i32, i32
  }
  func.func @transform_6(%arg0: i32, %arg1: i32) -> (i32, i32, i32) {
    %c0_i32 = arith.constant 0 : i32
    %c0_i32_0 = arith.constant 0 : i32
    return %arg0, %arg1, %c0_i32 : i32, i32, i32
  }
}

module attributes {stable_mosaic.version = 11 : i64} {
  func.func @_cbr_gap_kernel(%arg0: i32, %arg1: i32, %arg2: memref<2x64xi32, #tpu.memory_space<vmem>>, %arg3: memref<1x4x64xf32, #tpu.memory_space<vmem>>, %arg4: memref<3x3x4x1xf32, #tpu.memory_space<vmem>>, %arg5: memref<4x1xf32, #tpu.memory_space<vmem>>, %arg6: memref<4x1xf32, #tpu.memory_space<vmem>>, %arg7: memref<4x1xf32, #tpu.memory_space<vmem>>, %arg8: memref<1x4x64xf32, #tpu.memory_space<vmem>>, %arg9: memref<1x4x1xf32, #tpu.memory_space<vmem>>) attributes {dimension_semantics = [#tpu.dimension_semantics<parallel>, #tpu.dimension_semantics<parallel>], iteration_bounds = array<i64: 2, 1>, scalar_prefetch = 0 : i64, scratch_operands = 0 : i64, tpu.core_type = #tpu.core_type<tc>, window_params = [{pipeline_mode = #tpu.pipeline_mode<synchronous>, transform_indices = @transform_0, window_bounds = array<i64: 2, 64>}, {transform_indices = @transform_1, window_bounds = array<i64: 1, 4, 64>}, {transform_indices = @transform_2, window_bounds = array<i64: 3, 3, 4, 1>}, {transform_indices = @transform_3, window_bounds = array<i64: 4, 1>}, {transform_indices = @transform_4, window_bounds = array<i64: 4, 1>}, {transform_indices = @transform_5, window_bounds = array<i64: 4, 1>}, {transform_indices = @transform_6, window_bounds = array<i64: 1, 4, 64>}, {transform_indices = @transform_7, window_bounds = array<i64: 1, 4, 1>}]} {
    %c0 = arith.constant 0 : index
    %c0_0 = arith.constant 0 : index
    %0 = vector.load %arg2[%c0, %c0_0] : memref<2x64xi32, #tpu.memory_space<vmem>>, vector<2x64xi32>
    %c0_1 = arith.constant 0 : index
    %c0_2 = arith.constant 0 : index
    %c0_3 = arith.constant 0 : index
    %1 = vector.load %arg3[%c0_1, %c0_2, %c0_3] : memref<1x4x64xf32, #tpu.memory_space<vmem>>, vector<1x4x64xf32>
    %2 = vector.shape_cast %1 : vector<1x4x64xf32> to vector<4x64xf32>
    %3 = vector.extract_strided_slice %0 {offsets = [0, 0], sizes = [1, 64], strides = [1, 1]} : vector<2x64xi32> to vector<1x64xi32>
    %4 = vector.extract_strided_slice %0 {offsets = [1, 0], sizes = [1, 64], strides = [1, 1]} : vector<2x64xi32> to vector<1x64xi32>
    %c1 = arith.constant 1 : index
    %c1_4 = arith.constant 1 : index
    %c0_5 = arith.constant 0 : index
    %c0_6 = arith.constant 0 : index
    %5 = vector.load %arg4[%c1, %c1_4, %c0_5, %c0_6] : memref<3x3x4x1xf32, #tpu.memory_space<vmem>>, vector<1x1x4x1xf32>
    %6 = vector.shape_cast %5 : vector<1x1x4x1xf32> to vector<4x1xf32>
    %7 = vector.broadcast %6 : vector<4x1xf32> to vector<4x64xf32>
    %8 = arith.mulf %2, %7 : vector<4x64xf32>
    %c9_i32 = arith.constant 9 : i32
    %9 = tpu.dynamic_rotate %2 by %c9_i32 dim 1 : vector<4x64xf32>, i32 -> vector<4x64xf32>
    %c1_i32 = arith.constant 1 : i32
    %10 = vector.broadcast %c1_i32 : i32 to vector<1x64xi32>
    %11 = arith.cmpi sge, %3, %10 : vector<1x64xi32>
    %c1_i32_7 = arith.constant 1 : i32
    %12 = vector.broadcast %c1_i32_7 : i32 to vector<1x64xi32>
    %13 = arith.cmpi sge, %4, %12 : vector<1x64xi32>
    %14 = arith.andi %11, %13 : vector<1x64xi1>
    %cst = arith.constant 0.000000e+00 : f32
    %15 = vector.shape_cast %14 : vector<1x64xi1> to vector<1x64xi1>
    %16 = vector.broadcast %15 : vector<1x64xi1> to vector<4x64xi1>
    %17 = vector.broadcast %cst : f32 to vector<4x64xf32>
    %18 = arith.select %16, %9, %17 : vector<4x64xi1>, vector<4x64xf32>
    %c0_8 = arith.constant 0 : index
    %c0_9 = arith.constant 0 : index
    %c0_10 = arith.constant 0 : index
    %c0_11 = arith.constant 0 : index
    %19 = vector.load %arg4[%c0_8, %c0_9, %c0_10, %c0_11] : memref<3x3x4x1xf32, #tpu.memory_space<vmem>>, vector<1x1x4x1xf32>
    %20 = vector.shape_cast %19 : vector<1x1x4x1xf32> to vector<4x1xf32>
    %21 = vector.broadcast %20 : vector<4x1xf32> to vector<4x64xf32>
    %22 = arith.mulf %18, %21 : vector<4x64xf32>
    %23 = arith.addf %8, %22 : vector<4x64xf32>
    %c8_i32 = arith.constant 8 : i32
    %24 = tpu.dynamic_rotate %2 by %c8_i32 dim 1 : vector<4x64xf32>, i32 -> vector<4x64xf32>
    %c1_i32_12 = arith.constant 1 : i32
    %25 = vector.broadcast %c1_i32_12 : i32 to vector<1x64xi32>
    %26 = arith.cmpi sge, %3, %25 : vector<1x64xi32>
    %cst_13 = arith.constant 0.000000e+00 : f32
    %27 = vector.shape_cast %26 : vector<1x64xi1> to vector<1x64xi1>
    %28 = vector.broadcast %27 : vector<1x64xi1> to vector<4x64xi1>
    %29 = vector.broadcast %cst_13 : f32 to vector<4x64xf32>
    %30 = arith.select %28, %24, %29 : vector<4x64xi1>, vector<4x64xf32>
    %c0_14 = arith.constant 0 : index
    %c1_15 = arith.constant 1 : index
    %c0_16 = arith.constant 0 : index
    %c0_17 = arith.constant 0 : index
    %31 = vector.load %arg4[%c0_14, %c1_15, %c0_16, %c0_17] : memref<3x3x4x1xf32, #tpu.memory_space<vmem>>, vector<1x1x4x1xf32>
    %32 = vector.shape_cast %31 : vector<1x1x4x1xf32> to vector<4x1xf32>
    %33 = vector.broadcast %32 : vector<4x1xf32> to vector<4x64xf32>
    %34 = arith.mulf %30, %33 : vector<4x64xf32>
    %35 = arith.addf %23, %34 : vector<4x64xf32>
    %c7_i32 = arith.constant 7 : i32
    %36 = tpu.dynamic_rotate %2 by %c7_i32 dim 1 : vector<4x64xf32>, i32 -> vector<4x64xf32>
    %c1_i32_18 = arith.constant 1 : i32
    %37 = vector.broadcast %c1_i32_18 : i32 to vector<1x64xi32>
    %38 = arith.cmpi sge, %3, %37 : vector<1x64xi32>
    %c6_i32 = arith.constant 6 : i32
    %39 = vector.broadcast %c6_i32 : i32 to vector<1x64xi32>
    %40 = arith.cmpi sle, %4, %39 : vector<1x64xi32>
    %41 = arith.andi %38, %40 : vector<1x64xi1>
    %cst_19 = arith.constant 0.000000e+00 : f32
    %42 = vector.shape_cast %41 : vector<1x64xi1> to vector<1x64xi1>
    %43 = vector.broadcast %42 : vector<1x64xi1> to vector<4x64xi1>
    %44 = vector.broadcast %cst_19 : f32 to vector<4x64xf32>
    %45 = arith.select %43, %36, %44 : vector<4x64xi1>, vector<4x64xf32>
    %c0_20 = arith.constant 0 : index
    %c2 = arith.constant 2 : index
    %c0_21 = arith.constant 0 : index
    %c0_22 = arith.constant 0 : index
    %46 = vector.load %arg4[%c0_20, %c2, %c0_21, %c0_22] : memref<3x3x4x1xf32, #tpu.memory_space<vmem>>, vector<1x1x4x1xf32>
    %47 = vector.shape_cast %46 : vector<1x1x4x1xf32> to vector<4x1xf32>
    %48 = vector.broadcast %47 : vector<4x1xf32> to vector<4x64xf32>
    %49 = arith.mulf %45, %48 : vector<4x64xf32>
    %50 = arith.addf %35, %49 : vector<4x64xf32>
    %c1_i32_23 = arith.constant 1 : i32
    %51 = tpu.dynamic_rotate %2 by %c1_i32_23 dim 1 : vector<4x64xf32>, i32 -> vector<4x64xf32>
    %c1_i32_24 = arith.constant 1 : i32
    %52 = vector.broadcast %c1_i32_24 : i32 to vector<1x64xi32>
    %53 = arith.cmpi sge, %4, %52 : vector<1x64xi32>
    %cst_25 = arith.constant 0.000000e+00 : f32
    %54 = vector.shape_cast %53 : vector<1x64xi1> to vector<1x64xi1>
    %55 = vector.broadcast %54 : vector<1x64xi1> to vector<4x64xi1>
    %56 = vector.broadcast %cst_25 : f32 to vector<4x64xf32>
    %57 = arith.select %55, %51, %56 : vector<4x64xi1>, vector<4x64xf32>
    %c1_26 = arith.constant 1 : index
    %c0_27 = arith.constant 0 : index
    %c0_28 = arith.constant 0 : index
    %c0_29 = arith.constant 0 : index
    %58 = vector.load %arg4[%c1_26, %c0_27, %c0_28, %c0_29] : memref<3x3x4x1xf32, #tpu.memory_space<vmem>>, vector<1x1x4x1xf32>
    %59 = vector.shape_cast %58 : vector<1x1x4x1xf32> to vector<4x1xf32>
    %60 = vector.broadcast %59 : vector<4x1xf32> to vector<4x64xf32>
    %61 = arith.mulf %57, %60 : vector<4x64xf32>
    %62 = arith.addf %50, %61 : vector<4x64xf32>
    %c63_i32 = arith.constant 63 : i32
    %63 = tpu.dynamic_rotate %2 by %c63_i32 dim 1 : vector<4x64xf32>, i32 -> vector<4x64xf32>
    %c6_i32_30 = arith.constant 6 : i32
    %64 = vector.broadcast %c6_i32_30 : i32 to vector<1x64xi32>
    %65 = arith.cmpi sle, %4, %64 : vector<1x64xi32>
    %cst_31 = arith.constant 0.000000e+00 : f32
    %66 = vector.shape_cast %65 : vector<1x64xi1> to vector<1x64xi1>
    %67 = vector.broadcast %66 : vector<1x64xi1> to vector<4x64xi1>
    %68 = vector.broadcast %cst_31 : f32 to vector<4x64xf32>
    %69 = arith.select %67, %63, %68 : vector<4x64xi1>, vector<4x64xf32>
    %c1_32 = arith.constant 1 : index
    %c2_33 = arith.constant 2 : index
    %c0_34 = arith.constant 0 : index
    %c0_35 = arith.constant 0 : index
    %70 = vector.load %arg4[%c1_32, %c2_33, %c0_34, %c0_35] : memref<3x3x4x1xf32, #tpu.memory_space<vmem>>, vector<1x1x4x1xf32>
    %71 = vector.shape_cast %70 : vector<1x1x4x1xf32> to vector<4x1xf32>
    %72 = vector.broadcast %71 : vector<4x1xf32> to vector<4x64xf32>
    %73 = arith.mulf %69, %72 : vector<4x64xf32>
    %74 = arith.addf %62, %73 : vector<4x64xf32>
    %c57_i32 = arith.constant 57 : i32
    %75 = tpu.dynamic_rotate %2 by %c57_i32 dim 1 : vector<4x64xf32>, i32 -> vector<4x64xf32>
    %c6_i32_36 = arith.constant 6 : i32
    %76 = vector.broadcast %c6_i32_36 : i32 to vector<1x64xi32>
    %77 = arith.cmpi sle, %3, %76 : vector<1x64xi32>
    %c1_i32_37 = arith.constant 1 : i32
    %78 = vector.broadcast %c1_i32_37 : i32 to vector<1x64xi32>
    %79 = arith.cmpi sge, %4, %78 : vector<1x64xi32>
    %80 = arith.andi %77, %79 : vector<1x64xi1>
    %cst_38 = arith.constant 0.000000e+00 : f32
    %81 = vector.shape_cast %80 : vector<1x64xi1> to vector<1x64xi1>
    %82 = vector.broadcast %81 : vector<1x64xi1> to vector<4x64xi1>
    %83 = vector.broadcast %cst_38 : f32 to vector<4x64xf32>
    %84 = arith.select %82, %75, %83 : vector<4x64xi1>, vector<4x64xf32>
    %c2_39 = arith.constant 2 : index
    %c0_40 = arith.constant 0 : index
    %c0_41 = arith.constant 0 : index
    %c0_42 = arith.constant 0 : index
    %85 = vector.load %arg4[%c2_39, %c0_40, %c0_41, %c0_42] : memref<3x3x4x1xf32, #tpu.memory_space<vmem>>, vector<1x1x4x1xf32>
    %86 = vector.shape_cast %85 : vector<1x1x4x1xf32> to vector<4x1xf32>
    %87 = vector.broadcast %86 : vector<4x1xf32> to vector<4x64xf32>
    %88 = arith.mulf %84, %87 : vector<4x64xf32>
    %89 = arith.addf %74, %88 : vector<4x64xf32>
    %c56_i32 = arith.constant 56 : i32
    %90 = tpu.dynamic_rotate %2 by %c56_i32 dim 1 : vector<4x64xf32>, i32 -> vector<4x64xf32>
    %c6_i32_43 = arith.constant 6 : i32
    %91 = vector.broadcast %c6_i32_43 : i32 to vector<1x64xi32>
    %92 = arith.cmpi sle, %3, %91 : vector<1x64xi32>
    %cst_44 = arith.constant 0.000000e+00 : f32
    %93 = vector.shape_cast %92 : vector<1x64xi1> to vector<1x64xi1>
    %94 = vector.broadcast %93 : vector<1x64xi1> to vector<4x64xi1>
    %95 = vector.broadcast %cst_44 : f32 to vector<4x64xf32>
    %96 = arith.select %94, %90, %95 : vector<4x64xi1>, vector<4x64xf32>
    %c2_45 = arith.constant 2 : index
    %c1_46 = arith.constant 1 : index
    %c0_47 = arith.constant 0 : index
    %c0_48 = arith.constant 0 : index
    %97 = vector.load %arg4[%c2_45, %c1_46, %c0_47, %c0_48] : memref<3x3x4x1xf32, #tpu.memory_space<vmem>>, vector<1x1x4x1xf32>
    %98 = vector.shape_cast %97 : vector<1x1x4x1xf32> to vector<4x1xf32>
    %99 = vector.broadcast %98 : vector<4x1xf32> to vector<4x64xf32>
    %100 = arith.mulf %96, %99 : vector<4x64xf32>
    %101 = arith.addf %89, %100 : vector<4x64xf32>
    %c55_i32 = arith.constant 55 : i32
    %102 = tpu.dynamic_rotate %2 by %c55_i32 dim 1 : vector<4x64xf32>, i32 -> vector<4x64xf32>
    %c6_i32_49 = arith.constant 6 : i32
    %103 = vector.broadcast %c6_i32_49 : i32 to vector<1x64xi32>
    %104 = arith.cmpi sle, %3, %103 : vector<1x64xi32>
    %c6_i32_50 = arith.constant 6 : i32
    %105 = vector.broadcast %c6_i32_50 : i32 to vector<1x64xi32>
    %106 = arith.cmpi sle, %4, %105 : vector<1x64xi32>
    %107 = arith.andi %104, %106 : vector<1x64xi1>
    %cst_51 = arith.constant 0.000000e+00 : f32
    %108 = vector.shape_cast %107 : vector<1x64xi1> to vector<1x64xi1>
    %109 = vector.broadcast %108 : vector<1x64xi1> to vector<4x64xi1>
    %110 = vector.broadcast %cst_51 : f32 to vector<4x64xf32>
    %111 = arith.select %109, %102, %110 : vector<4x64xi1>, vector<4x64xf32>
    %c2_52 = arith.constant 2 : index
    %c2_53 = arith.constant 2 : index
    %c0_54 = arith.constant 0 : index
    %c0_55 = arith.constant 0 : index
    %112 = vector.load %arg4[%c2_52, %c2_53, %c0_54, %c0_55] : memref<3x3x4x1xf32, #tpu.memory_space<vmem>>, vector<1x1x4x1xf32>
    %113 = vector.shape_cast %112 : vector<1x1x4x1xf32> to vector<4x1xf32>
    %114 = vector.broadcast %113 : vector<4x1xf32> to vector<4x64xf32>
    %115 = arith.mulf %111, %114 : vector<4x64xf32>
    %116 = arith.addf %101, %115 : vector<4x64xf32>
    %c0_56 = arith.constant 0 : index
    %c0_57 = arith.constant 0 : index
    %117 = vector.load %arg5[%c0_56, %c0_57] : memref<4x1xf32, #tpu.memory_space<vmem>>, vector<4x1xf32>
    %c0_58 = arith.constant 0 : index
    %c0_59 = arith.constant 0 : index
    %118 = vector.load %arg6[%c0_58, %c0_59] : memref<4x1xf32, #tpu.memory_space<vmem>>, vector<4x1xf32>
    %c0_60 = arith.constant 0 : index
    %c0_61 = arith.constant 0 : index
    %119 = vector.load %arg7[%c0_60, %c0_61] : memref<4x1xf32, #tpu.memory_space<vmem>>, vector<4x1xf32>
    %120 = vector.broadcast %117 : vector<4x1xf32> to vector<4x64xf32>
    %121 = arith.mulf %116, %120 : vector<4x64xf32>
    %122 = vector.broadcast %118 : vector<4x1xf32> to vector<4x64xf32>
    %123 = arith.addf %121, %122 : vector<4x64xf32>
    %cst_62 = arith.constant 0.000000e+00 : f32
    %124 = vector.broadcast %cst_62 : f32 to vector<4x64xf32>
    %125 = arith.cmpf ogt, %123, %124 : vector<4x64xf32>
    %126 = vector.broadcast %119 : vector<4x1xf32> to vector<4x64xf32>
    %127 = arith.mulf %126, %123 : vector<4x64xf32>
    %128 = arith.select %125, %123, %127 : vector<4x64xi1>, vector<4x64xf32>
    %c0_63 = arith.constant 0 : index
    %c0_64 = arith.constant 0 : index
    %c0_65 = arith.constant 0 : index
    %129 = vector.load %arg8[%c0_63, %c0_64, %c0_65] : memref<1x4x64xf32, #tpu.memory_space<vmem>>, vector<1x4x64xf32>
    %130 = vector.shape_cast %129 : vector<1x4x64xf32> to vector<4x64xf32>
    %131 = vector.shape_cast %128 : vector<4x64xf32> to vector<1x4x64xf32>
    tpu.vector_store %arg8[%c0_63, %c0_64, %c0_65], %131 {strides = array<i32>} : memref<1x4x64xf32, #tpu.memory_space<vmem>>, vector<1x4x64xf32>,
    %cst_66 = arith.constant dense<0.000000e+00> : vector<4xf32>
    %132 = vector.multi_reduction <add>, %128, %cst_66 [1] : vector<4x64xf32> to vector<4xf32>
    %133 = vector.shape_cast %132 : vector<4xf32> to vector<4x1xf32>
    %cst_67 = arith.constant 1.562500e-02 : f32
    %134 = vector.broadcast %cst_67 : f32 to vector<4x1xf32>
    %135 = arith.mulf %133, %134 : vector<4x1xf32>
    %c0_68 = arith.constant 0 : index
    %c0_69 = arith.constant 0 : index
    %c0_70 = arith.constant 0 : index
    %136 = vector.load %arg9[%c0_68, %c0_69, %c0_70] : memref<1x4x1xf32, #tpu.memory_space<vmem>>, vector<1x4x1xf32>
    %137 = vector.shape_cast %136 : vector<1x4x1xf32> to vector<4x1xf32>
    %138 = vector.shape_cast %135 : vector<4x1xf32> to vector<1x4x1xf32>
    tpu.vector_store %arg9[%c0_68, %c0_69, %c0_70], %138 {strides = array<i32>} : memref<1x4x1xf32, #tpu.memory_space<vmem>>, vector<1x4x1xf32>,
    return
  }
  func.func @transform_0(%arg0: i32, %arg1: i32) -> (i32, i32) {
    %c0_i32 = arith.constant 0 : i32
    %c0_i32_0 = arith.constant 0 : i32
    %c0_i32_1 = arith.constant 0 : i32
    return %c0_i32, %c0_i32_0 : i32, i32
  }
  func.func @transform_1(%arg0: i32, %arg1: i32) -> (i32, i32, i32) {
    %c0_i32 = arith.constant 0 : i32
    %c0_i32_0 = arith.constant 0 : i32
    return %arg0, %arg1, %c0_i32 : i32, i32, i32
  }
  func.func @transform_2(%arg0: i32, %arg1: i32) -> (i32, i32, i32, i32) {
    %c0_i32 = arith.constant 0 : i32
    %c0_i32_0 = arith.constant 0 : i32
    %c0_i32_1 = arith.constant 0 : i32
    %c0_i32_2 = arith.constant 0 : i32
    return %c0_i32, %c0_i32_0, %arg1, %c0_i32_1 : i32, i32, i32, i32
  }
  func.func @transform_3(%arg0: i32, %arg1: i32) -> (i32, i32) {
    %c0_i32 = arith.constant 0 : i32
    %c0_i32_0 = arith.constant 0 : i32
    return %arg1, %c0_i32 : i32, i32
  }
  func.func @transform_4(%arg0: i32, %arg1: i32) -> (i32, i32) {
    %c0_i32 = arith.constant 0 : i32
    %c0_i32_0 = arith.constant 0 : i32
    return %arg1, %c0_i32 : i32, i32
  }
  func.func @transform_5(%arg0: i32, %arg1: i32) -> (i32, i32) {
    %c0_i32 = arith.constant 0 : i32
    %c0_i32_0 = arith.constant 0 : i32
    return %arg1, %c0_i32 : i32, i32
  }
  func.func @transform_6(%arg0: i32, %arg1: i32) -> (i32, i32, i32) {
    %c0_i32 = arith.constant 0 : i32
    %c0_i32_0 = arith.constant 0 : i32
    return %arg0, %arg1, %c0_i32 : i32, i32, i32
  }
  func.func @transform_7(%arg0: i32, %arg1: i32) -> (i32, i32, i32) {
    %c0_i32 = arith.constant 0 : i32
    %c0_i32_0 = arith.constant 0 : i32
    return %arg0, %arg1, %c0_i32 : i32, i32, i32
  }
}

module attributes {stable_mosaic.version = 11 : i64} {
  func.func @_proj_concat_kernel(%arg0: i32, %arg1: i32, %arg2: memref<2x64xi32, #tpu.memory_space<vmem>>, %arg3: memref<1x4x64xf32, #tpu.memory_space<vmem>>, %arg4: memref<1x4x64xf32, #tpu.memory_space<vmem>>, %arg5: memref<3x3x4x1xf32, #tpu.memory_space<vmem>>, %arg6: memref<1x4x1xf32, #tpu.memory_space<vmem>>, %arg7: memref<1x4x1xf32, #tpu.memory_space<vmem>>, %arg8: memref<4x1xf32, #tpu.memory_space<vmem>>, %arg9: memref<1x2x4x64xf32, #tpu.memory_space<vmem>>) attributes {dimension_semantics = [#tpu.dimension_semantics<parallel>, #tpu.dimension_semantics<parallel>], iteration_bounds = array<i64: 2, 1>, scalar_prefetch = 0 : i64, scratch_operands = 0 : i64, tpu.core_type = #tpu.core_type<tc>, window_params = [{pipeline_mode = #tpu.pipeline_mode<synchronous>, transform_indices = @transform_0, window_bounds = array<i64: 2, 64>}, {transform_indices = @transform_1, window_bounds = array<i64: 1, 4, 64>}, {transform_indices = @transform_2, window_bounds = array<i64: 1, 4, 64>}, {transform_indices = @transform_3, window_bounds = array<i64: 3, 3, 4, 1>}, {transform_indices = @transform_4, window_bounds = array<i64: 1, 4, 1>}, {transform_indices = @transform_5, window_bounds = array<i64: 1, 4, 1>}, {transform_indices = @transform_6, window_bounds = array<i64: 4, 1>}, {transform_indices = @transform_7, window_bounds = array<i64: 1, 2, 4, 64>}]} {
    %c0 = arith.constant 0 : index
    %c0_0 = arith.constant 0 : index
    %0 = vector.load %arg2[%c0, %c0_0] : memref<2x64xi32, #tpu.memory_space<vmem>>, vector<2x64xi32>
    %c0_1 = arith.constant 0 : index
    %c0_2 = arith.constant 0 : index
    %c0_3 = arith.constant 0 : index
    %1 = vector.load %arg3[%c0_1, %c0_2, %c0_3] : memref<1x4x64xf32, #tpu.memory_space<vmem>>, vector<1x4x64xf32>
    %2 = vector.shape_cast %1 : vector<1x4x64xf32> to vector<4x64xf32>
    %3 = vector.extract_strided_slice %0 {offsets = [0, 0], sizes = [1, 64], strides = [1, 1]} : vector<2x64xi32> to vector<1x64xi32>
    %4 = vector.extract_strided_slice %0 {offsets = [1, 0], sizes = [1, 64], strides = [1, 1]} : vector<2x64xi32> to vector<1x64xi32>
    %c1 = arith.constant 1 : index
    %c1_4 = arith.constant 1 : index
    %c0_5 = arith.constant 0 : index
    %c0_6 = arith.constant 0 : index
    %5 = vector.load %arg5[%c1, %c1_4, %c0_5, %c0_6] : memref<3x3x4x1xf32, #tpu.memory_space<vmem>>, vector<1x1x4x1xf32>
    %6 = vector.shape_cast %5 : vector<1x1x4x1xf32> to vector<4x1xf32>
    %7 = vector.broadcast %6 : vector<4x1xf32> to vector<4x64xf32>
    %8 = arith.mulf %2, %7 : vector<4x64xf32>
    %c9_i32 = arith.constant 9 : i32
    %9 = tpu.dynamic_rotate %2 by %c9_i32 dim 1 : vector<4x64xf32>, i32 -> vector<4x64xf32>
    %c1_i32 = arith.constant 1 : i32
    %10 = vector.broadcast %c1_i32 : i32 to vector<1x64xi32>
    %11 = arith.cmpi sge, %3, %10 : vector<1x64xi32>
    %c1_i32_7 = arith.constant 1 : i32
    %12 = vector.broadcast %c1_i32_7 : i32 to vector<1x64xi32>
    %13 = arith.cmpi sge, %4, %12 : vector<1x64xi32>
    %14 = arith.andi %11, %13 : vector<1x64xi1>
    %cst = arith.constant 0.000000e+00 : f32
    %15 = vector.shape_cast %14 : vector<1x64xi1> to vector<1x64xi1>
    %16 = vector.broadcast %15 : vector<1x64xi1> to vector<4x64xi1>
    %17 = vector.broadcast %cst : f32 to vector<4x64xf32>
    %18 = arith.select %16, %9, %17 : vector<4x64xi1>, vector<4x64xf32>
    %c0_8 = arith.constant 0 : index
    %c0_9 = arith.constant 0 : index
    %c0_10 = arith.constant 0 : index
    %c0_11 = arith.constant 0 : index
    %19 = vector.load %arg5[%c0_8, %c0_9, %c0_10, %c0_11] : memref<3x3x4x1xf32, #tpu.memory_space<vmem>>, vector<1x1x4x1xf32>
    %20 = vector.shape_cast %19 : vector<1x1x4x1xf32> to vector<4x1xf32>
    %21 = vector.broadcast %20 : vector<4x1xf32> to vector<4x64xf32>
    %22 = arith.mulf %18, %21 : vector<4x64xf32>
    %23 = arith.addf %8, %22 : vector<4x64xf32>
    %c8_i32 = arith.constant 8 : i32
    %24 = tpu.dynamic_rotate %2 by %c8_i32 dim 1 : vector<4x64xf32>, i32 -> vector<4x64xf32>
    %c1_i32_12 = arith.constant 1 : i32
    %25 = vector.broadcast %c1_i32_12 : i32 to vector<1x64xi32>
    %26 = arith.cmpi sge, %3, %25 : vector<1x64xi32>
    %cst_13 = arith.constant 0.000000e+00 : f32
    %27 = vector.shape_cast %26 : vector<1x64xi1> to vector<1x64xi1>
    %28 = vector.broadcast %27 : vector<1x64xi1> to vector<4x64xi1>
    %29 = vector.broadcast %cst_13 : f32 to vector<4x64xf32>
    %30 = arith.select %28, %24, %29 : vector<4x64xi1>, vector<4x64xf32>
    %c0_14 = arith.constant 0 : index
    %c1_15 = arith.constant 1 : index
    %c0_16 = arith.constant 0 : index
    %c0_17 = arith.constant 0 : index
    %31 = vector.load %arg5[%c0_14, %c1_15, %c0_16, %c0_17] : memref<3x3x4x1xf32, #tpu.memory_space<vmem>>, vector<1x1x4x1xf32>
    %32 = vector.shape_cast %31 : vector<1x1x4x1xf32> to vector<4x1xf32>
    %33 = vector.broadcast %32 : vector<4x1xf32> to vector<4x64xf32>
    %34 = arith.mulf %30, %33 : vector<4x64xf32>
    %35 = arith.addf %23, %34 : vector<4x64xf32>
    %c7_i32 = arith.constant 7 : i32
    %36 = tpu.dynamic_rotate %2 by %c7_i32 dim 1 : vector<4x64xf32>, i32 -> vector<4x64xf32>
    %c1_i32_18 = arith.constant 1 : i32
    %37 = vector.broadcast %c1_i32_18 : i32 to vector<1x64xi32>
    %38 = arith.cmpi sge, %3, %37 : vector<1x64xi32>
    %c6_i32 = arith.constant 6 : i32
    %39 = vector.broadcast %c6_i32 : i32 to vector<1x64xi32>
    %40 = arith.cmpi sle, %4, %39 : vector<1x64xi32>
    %41 = arith.andi %38, %40 : vector<1x64xi1>
    %cst_19 = arith.constant 0.000000e+00 : f32
    %42 = vector.shape_cast %41 : vector<1x64xi1> to vector<1x64xi1>
    %43 = vector.broadcast %42 : vector<1x64xi1> to vector<4x64xi1>
    %44 = vector.broadcast %cst_19 : f32 to vector<4x64xf32>
    %45 = arith.select %43, %36, %44 : vector<4x64xi1>, vector<4x64xf32>
    %c0_20 = arith.constant 0 : index
    %c2 = arith.constant 2 : index
    %c0_21 = arith.constant 0 : index
    %c0_22 = arith.constant 0 : index
    %46 = vector.load %arg5[%c0_20, %c2, %c0_21, %c0_22] : memref<3x3x4x1xf32, #tpu.memory_space<vmem>>, vector<1x1x4x1xf32>
    %47 = vector.shape_cast %46 : vector<1x1x4x1xf32> to vector<4x1xf32>
    %48 = vector.broadcast %47 : vector<4x1xf32> to vector<4x64xf32>
    %49 = arith.mulf %45, %48 : vector<4x64xf32>
    %50 = arith.addf %35, %49 : vector<4x64xf32>
    %c1_i32_23 = arith.constant 1 : i32
    %51 = tpu.dynamic_rotate %2 by %c1_i32_23 dim 1 : vector<4x64xf32>, i32 -> vector<4x64xf32>
    %c1_i32_24 = arith.constant 1 : i32
    %52 = vector.broadcast %c1_i32_24 : i32 to vector<1x64xi32>
    %53 = arith.cmpi sge, %4, %52 : vector<1x64xi32>
    %cst_25 = arith.constant 0.000000e+00 : f32
    %54 = vector.shape_cast %53 : vector<1x64xi1> to vector<1x64xi1>
    %55 = vector.broadcast %54 : vector<1x64xi1> to vector<4x64xi1>
    %56 = vector.broadcast %cst_25 : f32 to vector<4x64xf32>
    %57 = arith.select %55, %51, %56 : vector<4x64xi1>, vector<4x64xf32>
    %c1_26 = arith.constant 1 : index
    %c0_27 = arith.constant 0 : index
    %c0_28 = arith.constant 0 : index
    %c0_29 = arith.constant 0 : index
    %58 = vector.load %arg5[%c1_26, %c0_27, %c0_28, %c0_29] : memref<3x3x4x1xf32, #tpu.memory_space<vmem>>, vector<1x1x4x1xf32>
    %59 = vector.shape_cast %58 : vector<1x1x4x1xf32> to vector<4x1xf32>
    %60 = vector.broadcast %59 : vector<4x1xf32> to vector<4x64xf32>
    %61 = arith.mulf %57, %60 : vector<4x64xf32>
    %62 = arith.addf %50, %61 : vector<4x64xf32>
    %c63_i32 = arith.constant 63 : i32
    %63 = tpu.dynamic_rotate %2 by %c63_i32 dim 1 : vector<4x64xf32>, i32 -> vector<4x64xf32>
    %c6_i32_30 = arith.constant 6 : i32
    %64 = vector.broadcast %c6_i32_30 : i32 to vector<1x64xi32>
    %65 = arith.cmpi sle, %4, %64 : vector<1x64xi32>
    %cst_31 = arith.constant 0.000000e+00 : f32
    %66 = vector.shape_cast %65 : vector<1x64xi1> to vector<1x64xi1>
    %67 = vector.broadcast %66 : vector<1x64xi1> to vector<4x64xi1>
    %68 = vector.broadcast %cst_31 : f32 to vector<4x64xf32>
    %69 = arith.select %67, %63, %68 : vector<4x64xi1>, vector<4x64xf32>
    %c1_32 = arith.constant 1 : index
    %c2_33 = arith.constant 2 : index
    %c0_34 = arith.constant 0 : index
    %c0_35 = arith.constant 0 : index
    %70 = vector.load %arg5[%c1_32, %c2_33, %c0_34, %c0_35] : memref<3x3x4x1xf32, #tpu.memory_space<vmem>>, vector<1x1x4x1xf32>
    %71 = vector.shape_cast %70 : vector<1x1x4x1xf32> to vector<4x1xf32>
    %72 = vector.broadcast %71 : vector<4x1xf32> to vector<4x64xf32>
    %73 = arith.mulf %69, %72 : vector<4x64xf32>
    %74 = arith.addf %62, %73 : vector<4x64xf32>
    %c57_i32 = arith.constant 57 : i32
    %75 = tpu.dynamic_rotate %2 by %c57_i32 dim 1 : vector<4x64xf32>, i32 -> vector<4x64xf32>
    %c6_i32_36 = arith.constant 6 : i32
    %76 = vector.broadcast %c6_i32_36 : i32 to vector<1x64xi32>
    %77 = arith.cmpi sle, %3, %76 : vector<1x64xi32>
    %c1_i32_37 = arith.constant 1 : i32
    %78 = vector.broadcast %c1_i32_37 : i32 to vector<1x64xi32>
    %79 = arith.cmpi sge, %4, %78 : vector<1x64xi32>
    %80 = arith.andi %77, %79 : vector<1x64xi1>
    %cst_38 = arith.constant 0.000000e+00 : f32
    %81 = vector.shape_cast %80 : vector<1x64xi1> to vector<1x64xi1>
    %82 = vector.broadcast %81 : vector<1x64xi1> to vector<4x64xi1>
    %83 = vector.broadcast %cst_38 : f32 to vector<4x64xf32>
    %84 = arith.select %82, %75, %83 : vector<4x64xi1>, vector<4x64xf32>
    %c2_39 = arith.constant 2 : index
    %c0_40 = arith.constant 0 : index
    %c0_41 = arith.constant 0 : index
    %c0_42 = arith.constant 0 : index
    %85 = vector.load %arg5[%c2_39, %c0_40, %c0_41, %c0_42] : memref<3x3x4x1xf32, #tpu.memory_space<vmem>>, vector<1x1x4x1xf32>
    %86 = vector.shape_cast %85 : vector<1x1x4x1xf32> to vector<4x1xf32>
    %87 = vector.broadcast %86 : vector<4x1xf32> to vector<4x64xf32>
    %88 = arith.mulf %84, %87 : vector<4x64xf32>
    %89 = arith.addf %74, %88 : vector<4x64xf32>
    %c56_i32 = arith.constant 56 : i32
    %90 = tpu.dynamic_rotate %2 by %c56_i32 dim 1 : vector<4x64xf32>, i32 -> vector<4x64xf32>
    %c6_i32_43 = arith.constant 6 : i32
    %91 = vector.broadcast %c6_i32_43 : i32 to vector<1x64xi32>
    %92 = arith.cmpi sle, %3, %91 : vector<1x64xi32>
    %cst_44 = arith.constant 0.000000e+00 : f32
    %93 = vector.shape_cast %92 : vector<1x64xi1> to vector<1x64xi1>
    %94 = vector.broadcast %93 : vector<1x64xi1> to vector<4x64xi1>
    %95 = vector.broadcast %cst_44 : f32 to vector<4x64xf32>
    %96 = arith.select %94, %90, %95 : vector<4x64xi1>, vector<4x64xf32>
    %c2_45 = arith.constant 2 : index
    %c1_46 = arith.constant 1 : index
    %c0_47 = arith.constant 0 : index
    %c0_48 = arith.constant 0 : index
    %97 = vector.load %arg5[%c2_45, %c1_46, %c0_47, %c0_48] : memref<3x3x4x1xf32, #tpu.memory_space<vmem>>, vector<1x1x4x1xf32>
    %98 = vector.shape_cast %97 : vector<1x1x4x1xf32> to vector<4x1xf32>
    %99 = vector.broadcast %98 : vector<4x1xf32> to vector<4x64xf32>
    %100 = arith.mulf %96, %99 : vector<4x64xf32>
    %101 = arith.addf %89, %100 : vector<4x64xf32>
    %c55_i32 = arith.constant 55 : i32
    %102 = tpu.dynamic_rotate %2 by %c55_i32 dim 1 : vector<4x64xf32>, i32 -> vector<4x64xf32>
    %c6_i32_49 = arith.constant 6 : i32
    %103 = vector.broadcast %c6_i32_49 : i32 to vector<1x64xi32>
    %104 = arith.cmpi sle, %3, %103 : vector<1x64xi32>
    %c6_i32_50 = arith.constant 6 : i32
    %105 = vector.broadcast %c6_i32_50 : i32 to vector<1x64xi32>
    %106 = arith.cmpi sle, %4, %105 : vector<1x64xi32>
    %107 = arith.andi %104, %106 : vector<1x64xi1>
    %cst_51 = arith.constant 0.000000e+00 : f32
    %108 = vector.shape_cast %107 : vector<1x64xi1> to vector<1x64xi1>
    %109 = vector.broadcast %108 : vector<1x64xi1> to vector<4x64xi1>
    %110 = vector.broadcast %cst_51 : f32 to vector<4x64xf32>
    %111 = arith.select %109, %102, %110 : vector<4x64xi1>, vector<4x64xf32>
    %c2_52 = arith.constant 2 : index
    %c2_53 = arith.constant 2 : index
    %c0_54 = arith.constant 0 : index
    %c0_55 = arith.constant 0 : index
    %112 = vector.load %arg5[%c2_52, %c2_53, %c0_54, %c0_55] : memref<3x3x4x1xf32, #tpu.memory_space<vmem>>, vector<1x1x4x1xf32>
    %113 = vector.shape_cast %112 : vector<1x1x4x1xf32> to vector<4x1xf32>
    %114 = vector.broadcast %113 : vector<4x1xf32> to vector<4x64xf32>
    %115 = arith.mulf %111, %114 : vector<4x64xf32>
    %116 = arith.addf %101, %115 : vector<4x64xf32>
    %c0_56 = arith.constant 0 : index
    %c0_57 = arith.constant 0 : index
    %c0_58 = arith.constant 0 : index
    %117 = vector.load %arg6[%c0_56, %c0_57, %c0_58] : memref<1x4x1xf32, #tpu.memory_space<vmem>>, vector<1x4x1xf32>
    %118 = vector.shape_cast %117 : vector<1x4x1xf32> to vector<4x1xf32>
    %c0_59 = arith.constant 0 : index
    %c0_60 = arith.constant 0 : index
    %c0_61 = arith.constant 0 : index
    %119 = vector.load %arg7[%c0_59, %c0_60, %c0_61] : memref<1x4x1xf32, #tpu.memory_space<vmem>>, vector<1x4x1xf32>
    %120 = vector.shape_cast %119 : vector<1x4x1xf32> to vector<4x1xf32>
    %c0_62 = arith.constant 0 : index
    %c0_63 = arith.constant 0 : index
    %121 = vector.load %arg8[%c0_62, %c0_63] : memref<4x1xf32, #tpu.memory_space<vmem>>, vector<4x1xf32>
    %122 = vector.broadcast %118 : vector<4x1xf32> to vector<4x64xf32>
    %123 = arith.mulf %116, %122 : vector<4x64xf32>
    %124 = vector.broadcast %120 : vector<4x1xf32> to vector<4x64xf32>
    %125 = arith.addf %123, %124 : vector<4x64xf32>
    %cst_64 = arith.constant 0.000000e+00 : f32
    %126 = vector.broadcast %cst_64 : f32 to vector<4x64xf32>
    %127 = arith.cmpf ogt, %125, %126 : vector<4x64xf32>
    %128 = vector.broadcast %121 : vector<4x1xf32> to vector<4x64xf32>
    %129 = arith.mulf %128, %125 : vector<4x64xf32>
    %130 = arith.select %127, %125, %129 : vector<4x64xi1>, vector<4x64xf32>
    %c0_65 = arith.constant 0 : index
    %c0_66 = arith.constant 0 : index
    %c0_67 = arith.constant 0 : index
    %131 = vector.load %arg4[%c0_65, %c0_66, %c0_67] : memref<1x4x64xf32, #tpu.memory_space<vmem>>, vector<1x4x64xf32>
    %132 = vector.shape_cast %131 : vector<1x4x64xf32> to vector<4x64xf32>
    %c0_68 = arith.constant 0 : index
    %c0_69 = arith.constant 0 : index
    %c0_70 = arith.constant 0 : index
    %c0_71 = arith.constant 0 : index
    %133 = vector.load %arg9[%c0_68, %c0_69, %c0_70, %c0_71] : memref<1x2x4x64xf32, #tpu.memory_space<vmem>>, vector<1x1x4x64xf32>
    %134 = vector.shape_cast %133 : vector<1x1x4x64xf32> to vector<4x64xf32>
    %135 = vector.shape_cast %132 : vector<4x64xf32> to vector<1x1x4x64xf32>
    tpu.vector_store %arg9[%c0_68, %c0_69, %c0_70, %c0_71], %135 {strides = array<i32>} : memref<1x2x4x64xf32, #tpu.memory_space<vmem>>, vector<1x1x4x64xf32>,
    %c0_72 = arith.constant 0 : index
    %c1_73 = arith.constant 1 : index
    %c0_74 = arith.constant 0 : index
    %c0_75 = arith.constant 0 : index
    %136 = vector.load %arg9[%c0_72, %c1_73, %c0_74, %c0_75] : memref<1x2x4x64xf32, #tpu.memory_space<vmem>>, vector<1x1x4x64xf32>
    %137 = vector.shape_cast %136 : vector<1x1x4x64xf32> to vector<4x64xf32>
    %138 = vector.shape_cast %130 : vector<4x64xf32> to vector<1x1x4x64xf32>
    tpu.vector_store %arg9[%c0_72, %c1_73, %c0_74, %c0_75], %138 {strides = array<i32>} : memref<1x2x4x64xf32, #tpu.memory_space<vmem>>, vector<1x1x4x64xf32>,
    return
  }
  func.func @transform_0(%arg0: i32, %arg1: i32) -> (i32, i32) {
    %c0_i32 = arith.constant 0 : i32
    %c0_i32_0 = arith.constant 0 : i32
    %c0_i32_1 = arith.constant 0 : i32
    return %c0_i32, %c0_i32_0 : i32, i32
  }
  func.func @transform_1(%arg0: i32, %arg1: i32) -> (i32, i32, i32) {
    %c0_i32 = arith.constant 0 : i32
    %c0_i32_0 = arith.constant 0 : i32
    return %arg0, %arg1, %c0_i32 : i32, i32, i32
  }
  func.func @transform_2(%arg0: i32, %arg1: i32) -> (i32, i32, i32) {
    %c0_i32 = arith.constant 0 : i32
    %c0_i32_0 = arith.constant 0 : i32
    return %arg0, %arg1, %c0_i32 : i32, i32, i32
  }
  func.func @transform_3(%arg0: i32, %arg1: i32) -> (i32, i32, i32, i32) {
    %c0_i32 = arith.constant 0 : i32
    %c0_i32_0 = arith.constant 0 : i32
    %c0_i32_1 = arith.constant 0 : i32
    %c0_i32_2 = arith.constant 0 : i32
    return %c0_i32, %c0_i32_0, %arg1, %c0_i32_1 : i32, i32, i32, i32
  }
  func.func @transform_4(%arg0: i32, %arg1: i32) -> (i32, i32, i32) {
    %c0_i32 = arith.constant 0 : i32
    %c0_i32_0 = arith.constant 0 : i32
    return %arg0, %arg1, %c0_i32 : i32, i32, i32
  }
  func.func @transform_5(%arg0: i32, %arg1: i32) -> (i32, i32, i32) {
    %c0_i32 = arith.constant 0 : i32
    %c0_i32_0 = arith.constant 0 : i32
    return %arg0, %arg1, %c0_i32 : i32, i32, i32
  }
  func.func @transform_6(%arg0: i32, %arg1: i32) -> (i32, i32) {
    %c0_i32 = arith.constant 0 : i32
    %c0_i32_0 = arith.constant 0 : i32
    return %arg1, %c0_i32 : i32, i32
  }
  func.func @transform_7(%arg0: i32, %arg1: i32) -> (i32, i32, i32, i32) {
    %c0_i32 = arith.constant 0 : i32
    %c0_i32_0 = arith.constant 0 : i32
    %c0_i32_1 = arith.constant 0 : i32
    return %arg0, %c0_i32, %arg1, %c0_i32_0 : i32, i32, i32, i32
  }
}

</mosaic_0001>

<llo_original>
// kernel: strided_eff_dwise.4
$region0: #{strided_eff_dwise.4}
  #allocation0 [shape = 'u32[]', space=smem, size = 0x4, offset = 0x4, fixed_abs, tag = 'smem constant byte address 0x4 - core index']
  #allocation1 [shape = 'u32[144,128]{1,0:T(1,128)}', space=vmem, size = 0x12000, scoped, tag = 'internal scratch']
  %s0 = inlined_call_operand.vmem [shape: s32[2,64], index: 0, kind: input, shape index: {}]
  %s1 = inlined_call_operand.vmem [shape: f32[2,4,64], index: 1, kind: input, shape index: {}]
  %s2 = inlined_call_operand.vmem [shape: f32[3,3,4,1], index: 2, kind: input, shape index: {}]
  %s3 = inlined_call_operand.vmem [shape: f32[4,1], index: 3, kind: input, shape index: {}]
  %s4 = inlined_call_operand.vmem [shape: f32[4,1], index: 4, kind: input, shape index: {}]
  %s5 = inlined_call_operand.vmem [shape: f32[4,1], index: 5, kind: input, shape index: {}]
  %s6 = inlined_call_operand.vmem [shape: f32[2,4,64], index: 6, kind: output, shape index: {0}]
  %s7 = inlined_call_operand.vmem [shape: f32[2,4,1], index: 7, kind: output, shape index: {1}]
  %8 = xla_tuple %s6, %s7
  %s9 = sld [smem:[#allocation0]]
  $region65: #{strided_eff_dwise.4} parent=0
    _
  %s11 = ssub.s32 1, %s9
  %s12 = scalar_select 0, %s11, %s9
  loop: start=0, step=1, limit=4
  $region2: #{strided_eff_dwise.4} parent=0 // loop_pre_header
    _
  $region3: #{strided_eff_dwise.4} parent=0 // loop_header
    %s14 = sphi 0, %s18
    %p15 = scmp.ge.s32.totalorder %s14, 4
    %s21 = sphi 0, %s33
    %s22 = sphi 0, %s29
    %s23 = sphi 0, %s21
    %s24 = sphi 0, %s22
    %s25 = sphi 0, %s23
    %s26 = sphi 0, %s24
    %s34 = sphi 0, %s34
    %s36 = sphi 0, %s34
    %s37 = sphi 0, %s36
    %s51 = sphi 0, %s37
    %s59 = sphi 0, %s61
    %s62 = sphi 0, %s59
    %s63 = sphi 0, %s62
    %s79 = sphi 0, %s63
    %s85 = sphi 0, %s87
    %s88 = sphi 0, %s85
    %s89 = sphi 0, %s88
    %s105 = sphi 0, %s89
    %s111 = sphi 0, %s113
    %s114 = sphi 0, %s111
    %s115 = sphi 0, %s114
    %s131 = sphi 0, %s115
    %s137 = sphi 0, %s139
    %s140 = sphi 0, %s137
    %s141 = sphi 0, %s140
    %s157 = sphi 0, %s141
    %s163 = sphi 0, %s165
    %s166 = sphi 0, %s163
    %s167 = sphi 0, %s166
    %s183 = sphi 0, %s167
    %s191 = sphi 0, %s193
    %s194 = sphi 0, %s191
    %s195 = sphi 0, %s194
    %s211 = sphi 0, %s195
    %s219 = sphi 0, %s221
    %s222 = sphi 0, %s219
    %s223 = sphi 0, %s222
    %s239 = sphi 0, %s223
  $region4: #{strided_eff_dwise.4} parent=0 // loop_header_branch
    %17 = sbr.rel (%p15) target = $region8
  $region5: #{strided_eff_dwise.4} parent=0 // loop_body
    %s19 = ssub.s32 %s14, 1
    %s20 = ssub.s32 %s14, 2
    %s27 = sadd.s32 1, %s22
    %p28 = scmp.ge.s32.totalorder %s27, 1
    %s29 = scalar_select %p28, 0, %s27
    %s30 = sadd.s32 1, %s21
    %s31 = scalar_select %p28, %s30, %s21
    %p32 = scmp.ge.s32.totalorder %s31, 2
    %s33 = scalar_select %p32, 0, %s31
    %s35 = sadd.s32 %s34, 1
    %p38 = scmp.eq.s32.totalorder %s14, 1
    %p39 = scmp.ne.s32.totalorder %s34, %s36
    %p40 = scmp.eq.s32.totalorder %s14, 0
    %p41 = por %p39, %p40
    %p42 = scmp.ne.s32.totalorder %s34, %s36
    %p43 = scmp.eq.s32.totalorder %s19, 1
    %p44 = por %p42, %p43
    %p45 = scmp.ne.s32.totalorder %s36, %s37
    %p46 = scmp.eq.s32.totalorder %s19, 0
    %p47 = por %p45, %p46
    %p48 = scmp.ne.s32.totalorder %s36, %s37
    %p49 = scmp.eq.s32.totalorder %s20, 1
    %p50 = por %p48, %p49
    %p52 = scmp.ne.s32.totalorder %s37, %s51
    %p53 = scmp.eq.s32.totalorder %s20, 0
    %p54 = por %p52, %p53
    %s55 = ssub.s32 %s21, %s33
    %s56 = ssub.s32 %s22, %s29
    %s57 = sor.u32 %s55, %s56
    %p58 = scmp.eq.s32.totalorder %s57, 0
    %s60 = sadd.s32 %s59, 1
    %s61 = scalar_select %p58, %s59, %s60
    %p64 = pneg %p58
    %p65 = scmp.eq.s32.totalorder %s14, 1
    %p66 = por %p64, %p65
    %p67 = scmp.ne.s32.totalorder %s59, %s62
    %p68 = scmp.eq.s32.totalorder %s14, 0
    %p69 = por %p67, %p68
    %p70 = scmp.ne.s32.totalorder %s59, %s62
    %p71 = scmp.eq.s32.totalorder %s19, 1
    %p72 = por %p70, %p71
    %p73 = scmp.ne.s32.totalorder %s62, %s63
    %p74 = scmp.eq.s32.totalorder %s19, 0
    %p75 = por %p73, %p74
    %p76 = scmp.ne.s32.totalorder %s62, %s63
    %p77 = scmp.eq.s32.totalorder %s20, 1
    %p78 = por %p76, %p77
    %p80 = scmp.ne.s32.totalorder %s63, %s79
    %p81 = scmp.eq.s32.totalorder %s20, 0
    %p82 = por %p80, %p81
    %s83 = ssub.s32 %s22, %s29
    %p84 = scmp.eq.s32.totalorder %s83, 0
    %s86 = sadd.s32 %s85, 1
    %s87 = scalar_select %p84, %s85, %s86
    %p90 = pneg %p84
    %p91 = scmp.eq.s32.totalorder %s14, 1
    %p92 = por %p90, %p91
    %p93 = scmp.ne.s32.totalorder %s85, %s88
    %p94 = scmp.eq.s32.totalorder %s14, 0
    %p95 = por %p93, %p94
    %p96 = scmp.ne.s32.totalorder %s85, %s88
    %p97 = scmp.eq.s32.totalorder %s19, 1
    %p98 = por %p96, %p97
    %p99 = scmp.ne.s32.totalorder %s88, %s89
    %p100 = scmp.eq.s32.totalorder %s19, 0
    %p101 = por %p99, %p100
    %p102 = scmp.ne.s32.totalorder %s88, %s89
    %p103 = scmp.eq.s32.totalorder %s20, 1
    %p104 = por %p102, %p103
    %p106 = scmp.ne.s32.totalorder %s89, %s105
    %p107 = scmp.eq.s32.totalorder %s20, 0
    %p108 = por %p106, %p107
    %s109 = ssub.s32 %s22, %s29
    %p110 = scmp.eq.s32.totalorder %s109, 0
    %s112 = sadd.s32 %s111, 1
    %s113 = scalar_select %p110, %s111, %s112
    %p116 = pneg %p110
    %p117 = scmp.eq.s32.totalorder %s14, 1
    %p118 = por %p116, %p117
    %p119 = scmp.ne.s32.totalorder %s111, %s114
    %p120 = scmp.eq.s32.totalorder %s14, 0
    %p121 = por %p119, %p120
    %p122 = scmp.ne.s32.totalorder %s111, %s114
    %p123 = scmp.eq.s32.totalorder %s19, 1
    %p124 = por %p122, %p123
    %p125 = scmp.ne.s32.totalorder %s114, %s115
    %p126 = scmp.eq.s32.totalorder %s19, 0
    %p127 = por %p125, %p126
    %p128 = scmp.ne.s32.totalorder %s114, %s115
    %p129 = scmp.eq.s32.totalorder %s20, 1
    %p130 = por %p128, %p129
    %p132 = scmp.ne.s32.totalorder %s115, %s131
    %p133 = scmp.eq.s32.totalorder %s20, 0
    %p134 = por %p132, %p133
    %s135 = ssub.s32 %s22, %s29
    %p136 = scmp.eq.s32.totalorder %s135, 0
    %s138 = sadd.s32 %s137, 1
    %s139 = scalar_select %p136, %s137, %s138
    %p142 = pneg %p136
    %p143 = scmp.eq.s32.totalorder %s14, 1
    %p144 = por %p142, %p143
    %p145 = scmp.ne.s32.totalorder %s137, %s140
    %p146 = scmp.eq.s32.totalorder %s14, 0
    %p147 = por %p145, %p146
    %p148 = scmp.ne.s32.totalorder %s137, %s140
    %p149 = scmp.eq.s32.totalorder %s19, 1
    %p150 = por %p148, %p149
    %p151 = scmp.ne.s32.totalorder %s140, %s141
    %p152 = scmp.eq.s32.totalorder %s19, 0
    %p153 = por %p151, %p152
    %p154 = scmp.ne.s32.totalorder %s140, %s141
    %p155 = scmp.eq.s32.totalorder %s20, 1
    %p156 = por %p154, %p155
    %p158 = scmp.ne.s32.totalorder %s141, %s157
    %p159 = scmp.eq.s32.totalorder %s20, 0
    %p160 = por %p158, %p159
    %s161 = ssub.s32 %s22, %s29
    %p162 = scmp.eq.s32.totalorder %s161, 0
    %s164 = sadd.s32 %s163, 1
    %s165 = scalar_select %p162, %s163, %s164
    %p168 = pneg %p162
    %p169 = scmp.eq.s32.totalorder %s14, 1
    %p170 = por %p168, %p169
    %p171 = scmp.ne.s32.totalorder %s163, %s166
    %p172 = scmp.eq.s32.totalorder %s14, 0
    %p173 = por %p171, %p172
    %p174 = scmp.ne.s32.totalorder %s163, %s166
    %p175 = scmp.eq.s32.totalorder %s19, 1
    %p176 = por %p174, %p175
    %p177 = scmp.ne.s32.totalorder %s166, %s167
    %p178 = scmp.eq.s32.totalorder %s19, 0
    %p179 = por %p177, %p178
    %p180 = scmp.ne.s32.totalorder %s166, %s167
    %p181 = scmp.eq.s32.totalorder %s20, 1
    %p182 = por %p180, %p181
    %p184 = scmp.ne.s32.totalorder %s167, %s183
    %p185 = scmp.eq.s32.totalorder %s20, 0
    %p186 = por %p184, %p185
    %s187 = ssub.s32 %s21, %s33
    %s188 = ssub.s32 %s22, %s29
    %s189 = sor.u32 %s187, %s188
    %p190 = scmp.eq.s32.totalorder %s189, 0
    %s192 = sadd.s32 %s191, 1
    %s193 = scalar_select %p190, %s191, %s192
    %p196 = pneg %p190
    %p197 = scmp.eq.s32.totalorder %s14, 1
    %p198 = por %p196, %p197
    %p199 = scmp.ne.s32.totalorder %s191, %s194
    %p200 = scmp.eq.s32.totalorder %s14, 0
    %p201 = por %p199, %p200
    %p202 = scmp.ne.s32.totalorder %s191, %s194
    %p203 = scmp.eq.s32.totalorder %s19, 1
    %p204 = por %p202, %p203
    %p205 = scmp.ne.s32.totalorder %s194, %s195
    %p206 = scmp.eq.s32.totalorder %s19, 0
    %p207 = por %p205, %p206
    %p208 = scmp.ne.s32.totalorder %s194, %s195
    %p209 = scmp.eq.s32.totalorder %s20, 1
    %p210 = por %p208, %p209
    %p212 = scmp.ne.s32.totalorder %s195, %s211
    %p213 = scmp.eq.s32.totalorder %s20, 0
    %p214 = por %p212, %p213
    %s215 = ssub.s32 %s21, %s33
    %s216 = ssub.s32 %s22, %s29
    %s217 = sor.u32 %s215, %s216
    %p218 = scmp.eq.s32.totalorder %s217, 0
    %s220 = sadd.s32 %s219, 1
    %s221 = scalar_select %p218, %s219, %s220
    %p224 = pneg %p218
    %p225 = scmp.eq.s32.totalorder %s14, 1
    %p226 = por %p224, %p225
    %p227 = scmp.ne.s32.totalorder %s219, %s222
    %p228 = scmp.eq.s32.totalorder %s14, 0
    %p229 = por %p227, %p228
    %p230 = scmp.ne.s32.totalorder %s219, %s222
    %p231 = scmp.eq.s32.totalorder %s19, 1
    %p232 = por %p230, %p231
    %p233 = scmp.ne.s32.totalorder %s222, %s223
    %p234 = scmp.eq.s32.totalorder %s19, 0
    %p235 = por %p233, %p234
    %p236 = scmp.ne.s32.totalorder %s222, %s223
    %p237 = scmp.eq.s32.totalorder %s20, 1
    %p238 = por %p236, %p237
    %p240 = scmp.ne.s32.totalorder %s223, %s239
    %p241 = scmp.eq.s32.totalorder %s20, 0
    %p242 = por %p240, %p241
    %p243 = scmp.le.s32.totalorder 1, %s14
    %p244 = scmp.lt.s32.totalorder %s14, 3
    %p245 = pnand %p243, %p244
    %p246 = pneg %p245
    // Predicated region
    $region9: #{strided_eff_dwise.4} parent=5 // pred_check
      _
    $region10: #{strided_eff_dwise.4} parent=5 // pred_check_branch
      %248 = sbr.rel (%p245) target = $region12
    $region11: #{strided_eff_dwise.4} parent=5 // pred_region
      %s249 = ssub.s32 %s14, 1
      // Predicated region
      $region13: #{strided_eff_dwise.4} parent=11 // pred_check
        %p250 = pneg %p47
      $region14: #{strided_eff_dwise.4} parent=11 // pred_check_branch
        %252 = sbr.rel (%p250) target = $region16
      $region15: #{strided_eff_dwise.4} parent=11 // pred_region
        _
      $region16: #{strided_eff_dwise.4} parent=11 // pred_fallthru
        _
      // Predicated region
      $region17: #{strided_eff_dwise.4} parent=11 // pred_check
        %p253 = pneg %p101
      $region18: #{strided_eff_dwise.4} parent=11 // pred_check_branch
        %255 = sbr.rel (%p253) target = $region20
      $region19: #{strided_eff_dwise.4} parent=11 // pred_region
        %p256 = scmp.lt.s32.totalorder %s24, 0
        %s257 = scalar_select %p256, %s24, 0
        %s258 = smul.addr %s257, 4
        %s259 = scalar_lea.vmem %s2, %s258
      $region20: #{strided_eff_dwise.4} parent=11 // pred_fallthru
        _
      // Predicated region
      $region21: #{strided_eff_dwise.4} parent=11 // pred_check
        %p260 = pneg %p127
      $region22: #{strided_eff_dwise.4} parent=11 // pred_check_branch
        %262 = sbr.rel (%p260) target = $region24
      $region23: #{strided_eff_dwise.4} parent=11 // pred_region
        %p263 = scmp.lt.s32.totalorder %s24, 0
        %s264 = scalar_select %p263, %s24, 0
        %s265 = smul.addr %s264, 4
        %s266 = scalar_lea.vmem %s3, %s265
      $region24: #{strided_eff_dwise.4} parent=11 // pred_fallthru
        _
      // Predicated region
      $region25: #{strided_eff_dwise.4} parent=11 // pred_check
        %p267 = pneg %p153
      $region26: #{strided_eff_dwise.4} parent=11 // pred_check_branch
        %269 = sbr.rel (%p267) target = $region28
      $region27: #{strided_eff_dwise.4} parent=11 // pred_region
        %p270 = scmp.lt.s32.totalorder %s24, 0
        %s271 = scalar_select %p270, %s24, 0
        %s272 = smul.addr %s271, 4
        %s273 = scalar_lea.vmem %s4, %s272
      $region28: #{strided_eff_dwise.4} parent=11 // pred_fallthru
        _
      // Predicated region
      $region29: #{strided_eff_dwise.4} parent=11 // pred_check
        %p274 = pneg %p179
      $region30: #{strided_eff_dwise.4} parent=11 // pred_check_branch
        %276 = sbr.rel (%p274) target = $region32
      $region31: #{strided_eff_dwise.4} parent=11 // pred_region
        %p277 = scmp.lt.s32.totalorder %s24, 0
        %s278 = scalar_select %p277, %s24, 0
        %s279 = smul.addr %s278, 4
        %s280 = scalar_lea.vmem %s5, %s279
      $region32: #{strided_eff_dwise.4} parent=11 // pred_fallthru
        _
    $region12: #{strided_eff_dwise.4} parent=5 // pred_fallthru
      _
    %p281 = scmp.lt.s32.totalorder %s14, 2
    // Predicated region
    $region33: #{strided_eff_dwise.4} parent=5 // pred_check
      %p282 = pneg %p281
    $region34: #{strided_eff_dwise.4} parent=5 // pred_check_branch
      %284 = sbr.rel (%p282) target = $region36
    $region35: #{strided_eff_dwise.4} parent=5 // pred_region
      // Predicated region
      $region37: #{strided_eff_dwise.4} parent=35 // pred_check
        %p285 = pneg %p69
      $region38: #{strided_eff_dwise.4} parent=35 // pred_check_branch
        %287 = sbr.rel (%p285) target = $region40
      $region39: #{strided_eff_dwise.4} parent=35 // pred_region
        %p288 = scmp.lt.s32.totalorder %s21, 1
        %s289 = scalar_select %p288, %s21, 1
        %p290 = scmp.lt.s32.totalorder %s22, 0
        %s291 = scalar_select %p290, %s22, 0
        %s292 = sadd.s32 %s291, %s289
        %s293 = smul.addr %s292, 4
        %s294 = scalar_lea.vmem %s1, %s293
      $region40: #{strided_eff_dwise.4} parent=35 // pred_fallthru
        _
    $region36: #{strided_eff_dwise.4} parent=5 // pred_fallthru
      _
    %p295 = scmp.le.s32.totalorder 1, %s14
    %p296 = scmp.lt.s32.totalorder %s14, 3
    %p297 = pnand %p295, %p296
    %p298 = pneg %p297
    // Predicated region
    $region41: #{strided_eff_dwise.4} parent=5 // pred_check
      _
    $region42: #{strided_eff_dwise.4} parent=5 // pred_check_branch
      %300 = sbr.rel (%p297) target = $region44
    $region43: #{strided_eff_dwise.4} parent=5 // pred_region
      %s301 = ssub.s32 %s14, 1
      %p302 = pneg %p47
      %p303 = pneg %p44
      %p304 = scmp.lt.s32.totalorder %s23, 1
      %s305 = scalar_select %p304, %s23, 1
      %p306 = scmp.lt.s32.totalorder %s24, 0
      %s307 = scalar_select %p306, %s24, 0
      %s308 = sadd.s32 %s307, %s305
      %s309 = smul.addr %s308, 4
      %s310 = scalar_lea.vmem %s1, %s309
      %p311 = pneg %p75
      %p312 = pneg %p72
      %p313 = scmp.lt.s32.totalorder %s24, 0
      %s314 = scalar_select %p313, %s24, 0
      %s315 = smul.addr %s314, 4
      %s316 = scalar_lea.vmem %s2, %s315
      %p317 = pneg %p101
      %p318 = pneg %p98
      %p319 = scmp.lt.s32.totalorder %s24, 0
      %s320 = scalar_select %p319, %s24, 0
      %s321 = smul.addr %s320, 4
      %s322 = scalar_lea.vmem %s3, %s321
      %p323 = pneg %p127
      %p324 = pneg %p124
      %p325 = scmp.lt.s32.totalorder %s24, 0
      %s326 = scalar_select %p325, %s24, 0
      %s327 = smul.addr %s326, 4
      %s328 = scalar_lea.vmem %s4, %s327
      %p329 = pneg %p153
      %p330 = pneg %p150
      %p331 = scmp.lt.s32.totalorder %s24, 0
      %s332 = scalar_select %p331, %s24, 0
      %s333 = smul.addr %s332, 4
      %s334 = scalar_lea.vmem %s5, %s333
      %p335 = pneg %p179
      %p336 = pneg %p176
      %p337 = pneg %p207
      %p338 = pneg %p204
      %p339 = scmp.lt.s32.totalorder %s23, 1
      %s340 = scalar_select %p339, %s23, 1
      %p341 = scmp.lt.s32.totalorder %s24, 0
      %s342 = scalar_select %p341, %s24, 0
      %s343 = sadd.s32 %s342, %s340
      %s344 = smul.addr %s343, 4
      %s345 = scalar_lea.vmem %s6, %s344
      %p346 = pneg %p235
      %p347 = pneg %p232
      %p348 = scmp.lt.s32.totalorder %s23, 1
      %s349 = scalar_select %p348, %s23, 1
      %p350 = scmp.lt.s32.totalorder %s24, 0
      %s351 = scalar_select %p350, %s24, 0
      %s352 = sadd.s32 %s351, %s349
      %s353 = smul.addr %s352, 4
      %s354 = scalar_lea.vmem %s7, %s353
      %p355 = scmp.lt.s32.totalorder %s23, 1
      %s356 = scalar_select %p355, %s23, 1
      %p357 = scmp.lt.s32.totalorder %s24, 0
      %s358 = scalar_select %p357, %s24, 0
      %s359 = sadd.s32 %s358, %s356
      %s360 = smul.addr %s359, 4
      %s361 = scalar_lea.vmem %s1, %s360
      %p362 = scmp.lt.s32.totalorder %s24, 0
      %s363 = scalar_select %p362, %s24, 0
      %s364 = smul.addr %s363, 4
      %s365 = scalar_lea.vmem %s2, %s364
      %p366 = scmp.lt.s32.totalorder %s24, 0
      %s367 = scalar_select %p366, %s24, 0
      %s368 = smul.addr %s367, 4
      %s369 = scalar_lea.vmem %s3, %s368
      %p370 = scmp.lt.s32.totalorder %s24, 0
      %s371 = scalar_select %p370, %s24, 0
      %s372 = smul.addr %s371, 4
      %s373 = scalar_lea.vmem %s4, %s372
      %p374 = scmp.lt.s32.totalorder %s24, 0
      %s375 = scalar_select %p374, %s24, 0
      %s376 = smul.addr %s375, 4
      %s377 = scalar_lea.vmem %s5, %s376
      %p378 = scmp.lt.s32.totalorder %s23, 1
      %s379 = scalar_select %p378, %s23, 1
      %p380 = scmp.lt.s32.totalorder %s24, 0
      %s381 = scalar_select %p380, %s24, 0
      %s382 = sadd.s32 %s381, %s379
      %s383 = smul.addr %s382, 4
      %s384 = scalar_lea.vmem %s6, %s383
      %p385 = scmp.lt.s32.totalorder %s23, 1
      %s386 = scalar_select %p385, %s23, 1
      %p387 = scmp.lt.s32.totalorder %s24, 0
      %s388 = scalar_select %p387, %s24, 0
      %s389 = sadd.s32 %s388, %s386
      %s390 = smul.addr %s389, 4
      %s391 = scalar_lea.vmem %s7, %s390
      %v392 = vld [vmem:[%s0] sm:$0x3]
      %v393 = vld [vmem:[%s361] sm:$0xf]
      %s394 = scalar_lea.vmem %s365, 16
      %v395 = vld [vmem:[%s394] sm:$0xf]
      %397 = vset.pattern.permute.xlu0 0
      %398 = vperm.xlu0 %397, %v395
      %v399 = vpop.permute.xlu0 %398
      %v401 = vmul.f32 %v393, %v399
      %vm402 = vcmask 1048064
      %403 = vrot.lane.b32.xlu0 %v393, 64
      %v404 = vpop.permute.xlu0 %403
      %v405 = vsel %vm402, %v404, %v393
      %406 = vrot.lane.b32.xlu0 %v405, 64
      %v407 = vpop.permute.xlu0 %406
      %v408 = vsel %vm402, %v407, %v393
      %vm409 = vcmp.ge.s32.totalorder %v392, 1
      %v410 = vsel %vm409, 1, 0
      %v411 = vrot.slane %v410, 1
      %vm412 = vcmp.ne.s32.totalorder %v411, 0
      %vm413 = vmand %vm409, %vm412
      %v414 = vsel %vm413, 1, 0
      %v415 = vlaneseq
      %v416 = vshrl.u32 %v415, 7
      %v417 = vsub.s32 0, %v416
      %v418 = vrot.slane %v414, %v417
      %vm419 = vcmp.eq.s32.totalorder %v418, 1
      %421 = vrot.lane.b32.xlu0 %v408, 73
      %v422 = vpop.permute.xlu0 %421
      %v424 = vsel %vm419, %v422, 0.0
      %v425 = vld [vmem:[%s365] sm:$0xf]
      %427 = vset.pattern.permute.xlu0 0
      %428 = vperm.xlu0 %427, %v425
      %v429 = vpop.permute.xlu0 %428
      %v431 = vmul.f32 %v424, %v429
      %v432 = vadd.f32 %v401, %v431
      %v433 = vlaneseq
      %v434 = vshrl.u32 %v433, 7
      %v435 = vsub.s32 0, %v434
      %v436 = vrot.slane %v410, %v435
      %vm437 = vcmp.eq.s32.totalorder %v436, 1
      %438 = vrot.lane.b32.xlu0 %v408, 72
      %v439 = vpop.permute.xlu0 %438
      %v441 = vsel %vm437, %v439, 0.0
      %s442 = scalar_lea.vmem %s365, 4
      %v443 = vld [vmem:[%s442] sm:$0xf]
      %445 = vset.pattern.permute.xlu0 0
      %446 = vperm.xlu0 %445, %v443
      %v447 = vpop.permute.xlu0 %446
      %v449 = vmul.f32 %v441, %v447
      %v450 = vadd.f32 %v432, %v449
      %vm451 = vcmp.le.s32.totalorder %v392, 6
      %v452 = vsel %vm451, 1, 0
      %v453 = vrot.slane %v452, 1
      %vm454 = vcmp.ne.s32.totalorder %v453, 0
      %vm455 = vmand %vm409, %vm454
      %v456 = vsel %vm455, 1, 0
      %v457 = vlaneseq
      %v458 = vshrl.u32 %v457, 7
      %v459 = vsub.s32 0, %v458
      %v460 = vrot.slane %v456, %v459
      %vm461 = vcmp.eq.s32.totalorder %v460, 1
      %462 = vrot.lane.b32.xlu0 %v408, 71
      %v463 = vpop.permute.xlu0 %462
      %v465 = vsel %vm461, %v463, 0.0
      %s466 = scalar_lea.vmem %s365, 8
      %v467 = vld [vmem:[%s466] sm:$0xf]
      %469 = vset.pattern.permute.xlu0 0
      %470 = vperm.xlu0 %469, %v467
      %v471 = vpop.permute.xlu0 %470
      %v473 = vmul.f32 %v465, %v471
      %v474 = vadd.f32 %v450, %v473
      %v475 = vlaneseq
      %v476 = vshrl.u32 %v475, 7
      %v477 = vsub.s32 1, %v476
      %v478 = vrot.slane %v410, %v477
      %vm479 = vcmp.eq.s32.totalorder %v478, 1
      %480 = vrot.lane.b32.xlu0 %v408, 65
      %v481 = vpop.permute.xlu0 %480
      %v483 = vsel %vm479, %v481, 0.0
      %s484 = scalar_lea.vmem %s365, 12
      %v485 = vld [vmem:[%s484] sm:$0xf]
      %487 = vset.pattern.permute.xlu0 0
      %488 = vperm.xlu0 %487, %v485
      %v489 = vpop.permute.xlu0 %488
      %v491 = vmul.f32 %v483, %v489
      %v492 = vadd.f32 %v474, %v491
      %v493 = vlaneseq
      %v494 = vshrl.u32 %v493, 7
      %v495 = vsub.s32 1, %v494
      %v496 = vrot.slane %v452, %v495
      %vm497 = vcmp.eq.s32.totalorder %v496, 1
      %498 = vrot.lane.b32.xlu0 %v408, 127
      %v499 = vpop.permute.xlu0 %498
      %v501 = vsel %vm497, %v499, 0.0
      %s502 = scalar_lea.vmem %s365, 20
      %v503 = vld [vmem:[%s502] sm:$0xf]
      %505 = vset.pattern.permute.xlu0 0
      %506 = vperm.xlu0 %505, %v503
      %v507 = vpop.permute.xlu0 %506
      %v509 = vmul.f32 %v501, %v507
      %v510 = vadd.f32 %v492, %v509
      %vm511 = vmand %vm451, %vm412
      %v512 = vsel %vm511, 1, 0
      %v513 = vlaneseq
      %v514 = vshrl.u32 %v513, 7
      %v515 = vsub.s32 0, %v514
      %v516 = vrot.slane %v512, %v515
      %vm517 = vcmp.eq.s32.totalorder %v516, 1
      %518 = vrot.lane.b32.xlu0 %v408, 121
      %v519 = vpop.permute.xlu0 %518
      %v521 = vsel %vm517, %v519, 0.0
      %s522 = scalar_lea.vmem %s365, 24
      %v523 = vld [vmem:[%s522] sm:$0xf]
      %525 = vset.pattern.permute.xlu0 0
      %526 = vperm.xlu0 %525, %v523
      %v527 = vpop.permute.xlu0 %526
      %v529 = vmul.f32 %v521, %v527
      %v530 = vadd.f32 %v510, %v529
      %v531 = vlaneseq
      %v532 = vshrl.u32 %v531, 7
      %v533 = vsub.s32 0, %v532
      %v534 = vrot.slane %v452, %v533
      %vm535 = vcmp.eq.s32.totalorder %v534, 1
      %536 = vrot.lane.b32.xlu0 %v408, 120
      %v537 = vpop.permute.xlu0 %536
      %v539 = vsel %vm535, %v537, 0.0
      %s540 = scalar_lea.vmem %s365, 28
      %v541 = vld [vmem:[%s540] sm:$0xf]
      %543 = vset.pattern.permute.xlu0 0
      %544 = vperm.xlu0 %543, %v541
      %v545 = vpop.permute.xlu0 %544
      %v547 = vmul.f32 %v539, %v545
      %v548 = vadd.f32 %v530, %v547
      %vm549 = vmand %vm451, %vm454
      %v550 = vsel %vm549, 1, 0
      %v551 = vlaneseq
      %v552 = vshrl.u32 %v551, 7
      %v553 = vsub.s32 0, %v552
      %v554 = vrot.slane %v550, %v553
      %vm555 = vcmp.eq.s32.totalorder %v554, 1
      %556 = vrot.lane.b32.xlu0 %v408, 119
      %v557 = vpop.permute.xlu0 %556
      %v559 = vsel %vm555, %v557, 0.0
      %s560 = scalar_lea.vmem %s365, 32
      %v561 = vld [vmem:[%s560] sm:$0xf]
      %563 = vset.pattern.permute.xlu0 0
      %564 = vperm.xlu0 %563, %v561
      %v565 = vpop.permute.xlu0 %564
      %v567 = vmul.f32 %v559, %v565
      %v568 = vadd.f32 %v548, %v567
      %v569 = vld [vmem:[%s369] sm:$0xf]
      %v570 = vld [vmem:[%s373] sm:$0xf]
      %v571 = vld [vmem:[%s377] sm:$0xf]
      %573 = vset.pattern.permute.xlu0 0
      %574 = vperm.xlu0 %573, %v569
      %v575 = vpop.permute.xlu0 %574
      %v577 = vmul.f32 %v568, %v575
      %579 = vset.pattern.permute.xlu0 0
      %580 = vperm.xlu0 %579, %v570
      %v581 = vpop.permute.xlu0 %580
      %v583 = vadd.f32 %v577, %v581
      %vm584 = vcmp.gt.f32.partialorder %v583, 0.0
      %586 = vset.pattern.permute.xlu0 0
      %587 = vperm.xlu0 %586, %v571
      %v588 = vpop.permute.xlu0 %587
      %v590 = vmul.f32 %v588, %v583
      %v591 = vsel %vm584, %v583, %v590
      %vm592 = vcmask 519168
      %593 = vst.msk [vmem:[%s384] sm:$0xf] %vm592, %v591
      %v594 = vsel %vm592, %v591, 0.0
      %595 = vadd.xlane.f32.xlu0 %v594
      %v596 = vpop.xlane.xlu0 %595
      %v597 = vmul.f32 %v596, 0.015625
      %vm598 = vcmask 3072
      %599 = vst.msk [vmem:[%s391] sm:$0xf] %vm598, %v597
      %p600 = scmp.lt.s32.totalorder %s23, 1
      %s601 = scalar_select %p600, %s23, 1
      %p602 = scmp.lt.s32.totalorder %s24, 0
      %s603 = scalar_select %p602, %s24, 0
      %s604 = sadd.s32 %s603, %s601
      %s605 = smul.addr %s604, 4
      %s606 = scalar_lea.vmem %s6, %s605
      %p607 = scmp.lt.s32.totalorder %s23, 1
      %s608 = scalar_select %p607, %s23, 1
      %p609 = scmp.lt.s32.totalorder %s24, 0
      %s610 = scalar_select %p609, %s24, 0
      %s611 = sadd.s32 %s610, %s608
      %s612 = smul.addr %s611, 4
      %s613 = scalar_lea.vmem %s7, %s612
      // Predicated region
      $region45: #{strided_eff_dwise.4} parent=43 // pred_check
        %p614 = pneg %p204
      $region46: #{strided_eff_dwise.4} parent=43 // pred_check_branch
        %616 = sbr.rel (%p614) target = $region48
      $region47: #{strided_eff_dwise.4} parent=43 // pred_region
        _
      $region48: #{strided_eff_dwise.4} parent=43 // pred_fallthru
        _
      // Predicated region
      $region49: #{strided_eff_dwise.4} parent=43 // pred_check
        %p617 = pneg %p232
      $region50: #{strided_eff_dwise.4} parent=43 // pred_check_branch
        %619 = sbr.rel (%p617) target = $region52
      $region51: #{strided_eff_dwise.4} parent=43 // pred_region
        _
      $region52: #{strided_eff_dwise.4} parent=43 // pred_fallthru
        _
    $region44: #{strided_eff_dwise.4} parent=5 // pred_fallthru
      _
    %p620 = scmp.le.s32.totalorder 2, %s14
    // Predicated region
    $region53: #{strided_eff_dwise.4} parent=5 // pred_check
      %p621 = pneg %p620
    $region54: #{strided_eff_dwise.4} parent=5 // pred_check_branch
      %623 = sbr.rel (%p621) target = $region56
    $region55: #{strided_eff_dwise.4} parent=5 // pred_region
      %s624 = ssub.s32 %s14, 2
      // Predicated region
      $region57: #{strided_eff_dwise.4} parent=55 // pred_check
        %p625 = pneg %p210
      $region58: #{strided_eff_dwise.4} parent=55 // pred_check_branch
        %627 = sbr.rel (%p625) target = $region60
      $region59: #{strided_eff_dwise.4} parent=55 // pred_region
        %p628 = scmp.lt.s32.totalorder %s25, 1
        %s629 = scalar_select %p628, %s25, 1
        %p630 = scmp.lt.s32.totalorder %s26, 0
        %s631 = scalar_select %p630, %s26, 0
        %s632 = sadd.s32 %s631, %s629
        %s633 = smul.addr %s632, 4
        %s634 = scalar_lea.vmem %s6, %s633
      $region60: #{strided_eff_dwise.4} parent=55 // pred_fallthru
        _
      // Predicated region
      $region61: #{strided_eff_dwise.4} parent=55 // pred_check
        %p635 = pneg %p238
      $region62: #{strided_eff_dwise.4} parent=55 // pred_check_branch
        %637 = sbr.rel (%p635) target = $region64
      $region63: #{strided_eff_dwise.4} parent=55 // pred_region
        %p638 = scmp.lt.s32.totalorder %s25, 1
        %s639 = scalar_select %p638, %s25, 1
        %p640 = scmp.lt.s32.totalorder %s26, 0
        %s641 = scalar_select %p640, %s26, 0
        %s642 = sadd.s32 %s641, %s639
        %s643 = smul.addr %s642, 4
        %s644 = scalar_lea.vmem %s7, %s643
      $region64: #{strided_eff_dwise.4} parent=55 // pred_fallthru
        _
    $region56: #{strided_eff_dwise.4} parent=5 // pred_fallthru
      _
  $region6: #{strided_eff_dwise.4} parent=0 // loop_footer
    %s18 = sadd.s32 1, %s14
  $region7: #{strided_eff_dwise.4} parent=0 // loop_footer_branch
    %13 = sbr.rel target = $region3
  $region8: #{strided_eff_dwise.4} parent=0 // loop_exit
    _

// kernel: strided_eff_dwise.5
$region0: #{strided_eff_dwise.5}
  #allocation0 [shape = 'u32[]', space=smem, size = 0x4, offset = 0x4, fixed_abs, tag = 'smem constant byte address 0x4 - core index']
  #allocation1 [shape = 'u32[144,128]{1,0:T(1,128)}', space=vmem, size = 0x12000, scoped, tag = 'internal scratch']
  %s0 = inlined_call_operand.vmem [shape: s32[2,64], index: 0, kind: input, shape index: {}]
  %s1 = inlined_call_operand.vmem [shape: f32[2,4,64], index: 1, kind: input, shape index: {}]
  %s2 = inlined_call_operand.vmem [shape: f32[2,4,64], index: 2, kind: input, shape index: {}]
  %s3 = inlined_call_operand.vmem [shape: f32[3,3,4,1], index: 3, kind: input, shape index: {}]
  %s4 = inlined_call_operand.vmem [shape: f32[2,4,1], index: 4, kind: input, shape index: {}]
  %s5 = inlined_call_operand.vmem [shape: f32[2,4,1], index: 5, kind: input, shape index: {}]
  %s6 = inlined_call_operand.vmem [shape: f32[4,1], index: 6, kind: input, shape index: {}]
  %s7 = inlined_call_operand.vmem [shape: f32[2,2,4,64], index: 7, kind: output, shape index: {}]
  %s8 = sld [smem:[#allocation0]]
  $region61: #{strided_eff_dwise.5} parent=0
    _
  %s10 = ssub.s32 1, %s8
  %s11 = scalar_select 0, %s10, %s8
  loop: start=0, step=1, limit=4
  $region2: #{strided_eff_dwise.5} parent=0 // loop_pre_header
    _
  $region3: #{strided_eff_dwise.5} parent=0 // loop_header
    %s13 = sphi 0, %s17
    %p14 = scmp.ge.s32.totalorder %s13, 4
    %s20 = sphi 0, %s32
    %s21 = sphi 0, %s28
    %s22 = sphi 0, %s20
    %s23 = sphi 0, %s21
    %s24 = sphi 0, %s22
    %s25 = sphi 0, %s23
    %s33 = sphi 0, %s33
    %s35 = sphi 0, %s33
    %s36 = sphi 0, %s35
    %s50 = sphi 0, %s36
    %s58 = sphi 0, %s60
    %s61 = sphi 0, %s58
    %s62 = sphi 0, %s61
    %s78 = sphi 0, %s62
    %s86 = sphi 0, %s88
    %s89 = sphi 0, %s86
    %s90 = sphi 0, %s89
    %s106 = sphi 0, %s90
    %s112 = sphi 0, %s114
    %s115 = sphi 0, %s112
    %s116 = sphi 0, %s115
    %s132 = sphi 0, %s116
    %s140 = sphi 0, %s142
    %s143 = sphi 0, %s140
    %s144 = sphi 0, %s143
    %s160 = sphi 0, %s144
    %s168 = sphi 0, %s170
    %s171 = sphi 0, %s168
    %s172 = sphi 0, %s171
    %s188 = sphi 0, %s172
    %s194 = sphi 0, %s196
    %s197 = sphi 0, %s194
    %s198 = sphi 0, %s197
    %s214 = sphi 0, %s198
    %s222 = sphi 0, %s224
    %s225 = sphi 0, %s222
    %s226 = sphi 0, %s225
    %s242 = sphi 0, %s226
  $region4: #{strided_eff_dwise.5} parent=0 // loop_header_branch
    %16 = sbr.rel (%p14) target = $region8
  $region5: #{strided_eff_dwise.5} parent=0 // loop_body
    %s18 = ssub.s32 %s13, 1
    %s19 = ssub.s32 %s13, 2
    %s26 = sadd.s32 1, %s21
    %p27 = scmp.ge.s32.totalorder %s26, 1
    %s28 = scalar_select %p27, 0, %s26
    %s29 = sadd.s32 1, %s20
    %s30 = scalar_select %p27, %s29, %s20
    %p31 = scmp.ge.s32.totalorder %s30, 2
    %s32 = scalar_select %p31, 0, %s30
    %s34 = sadd.s32 %s33, 1
    %p37 = scmp.eq.s32.totalorder %s13, 1
    %p38 = scmp.ne.s32.totalorder %s33, %s35
    %p39 = scmp.eq.s32.totalorder %s13, 0
    %p40 = por %p38, %p39
    %p41 = scmp.ne.s32.totalorder %s33, %s35
    %p42 = scmp.eq.s32.totalorder %s18, 1
    %p43 = por %p41, %p42
    %p44 = scmp.ne.s32.totalorder %s35, %s36
    %p45 = scmp.eq.s32.totalorder %s18, 0
    %p46 = por %p44, %p45
    %p47 = scmp.ne.s32.totalorder %s35, %s36
    %p48 = scmp.eq.s32.totalorder %s19, 1
    %p49 = por %p47, %p48
    %p51 = scmp.ne.s32.totalorder %s36, %s50
    %p52 = scmp.eq.s32.totalorder %s19, 0
    %p53 = por %p51, %p52
    %s54 = ssub.s32 %s20, %s32
    %s55 = ssub.s32 %s21, %s28
    %s56 = sor.u32 %s54, %s55
    %p57 = scmp.eq.s32.totalorder %s56, 0
    %s59 = sadd.s32 %s58, 1
    %s60 = scalar_select %p57, %s58, %s59
    %p63 = pneg %p57
    %p64 = scmp.eq.s32.totalorder %s13, 1
    %p65 = por %p63, %p64
    %p66 = scmp.ne.s32.totalorder %s58, %s61
    %p67 = scmp.eq.s32.totalorder %s13, 0
    %p68 = por %p66, %p67
    %p69 = scmp.ne.s32.totalorder %s58, %s61
    %p70 = scmp.eq.s32.totalorder %s18, 1
    %p71 = por %p69, %p70
    %p72 = scmp.ne.s32.totalorder %s61, %s62
    %p73 = scmp.eq.s32.totalorder %s18, 0
    %p74 = por %p72, %p73
    %p75 = scmp.ne.s32.totalorder %s61, %s62
    %p76 = scmp.eq.s32.totalorder %s19, 1
    %p77 = por %p75, %p76
    %p79 = scmp.ne.s32.totalorder %s62, %s78
    %p80 = scmp.eq.s32.totalorder %s19, 0
    %p81 = por %p79, %p80
    %s82 = ssub.s32 %s20, %s32
    %s83 = ssub.s32 %s21, %s28
    %s84 = sor.u32 %s82, %s83
    %p85 = scmp.eq.s32.totalorder %s84, 0
    %s87 = sadd.s32 %s86, 1
    %s88 = scalar_select %p85, %s86, %s87
    %p91 = pneg %p85
    %p92 = scmp.eq.s32.totalorder %s13, 1
    %p93 = por %p91, %p92
    %p94 = scmp.ne.s32.totalorder %s86, %s89
    %p95 = scmp.eq.s32.totalorder %s13, 0
    %p96 = por %p94, %p95
    %p97 = scmp.ne.s32.totalorder %s86, %s89
    %p98 = scmp.eq.s32.totalorder %s18, 1
    %p99 = por %p97, %p98
    %p100 = scmp.ne.s32.totalorder %s89, %s90
    %p101 = scmp.eq.s32.totalorder %s18, 0
    %p102 = por %p100, %p101
    %p103 = scmp.ne.s32.totalorder %s89, %s90
    %p104 = scmp.eq.s32.totalorder %s19, 1
    %p105 = por %p103, %p104
    %p107 = scmp.ne.s32.totalorder %s90, %s106
    %p108 = scmp.eq.s32.totalorder %s19, 0
    %p109 = por %p107, %p108
    %s110 = ssub.s32 %s21, %s28
    %p111 = scmp.eq.s32.totalorder %s110, 0
    %s113 = sadd.s32 %s112, 1
    %s114 = scalar_select %p111, %s112, %s113
    %p117 = pneg %p111
    %p118 = scmp.eq.s32.totalorder %s13, 1
    %p119 = por %p117, %p118
    %p120 = scmp.ne.s32.totalorder %s112, %s115
    %p121 = scmp.eq.s32.totalorder %s13, 0
    %p122 = por %p120, %p121
    %p123 = scmp.ne.s32.totalorder %s112, %s115
    %p124 = scmp.eq.s32.totalorder %s18, 1
    %p125 = por %p123, %p124
    %p126 = scmp.ne.s32.totalorder %s115, %s116
    %p127 = scmp.eq.s32.totalorder %s18, 0
    %p128 = por %p126, %p127
    %p129 = scmp.ne.s32.totalorder %s115, %s116
    %p130 = scmp.eq.s32.totalorder %s19, 1
    %p131 = por %p129, %p130
    %p133 = scmp.ne.s32.totalorder %s116, %s132
    %p134 = scmp.eq.s32.totalorder %s19, 0
    %p135 = por %p133, %p134
    %s136 = ssub.s32 %s20, %s32
    %s137 = ssub.s32 %s21, %s28
    %s138 = sor.u32 %s136, %s137
    %p139 = scmp.eq.s32.totalorder %s138, 0
    %s141 = sadd.s32 %s140, 1
    %s142 = scalar_select %p139, %s140, %s141
    %p145 = pneg %p139
    %p146 = scmp.eq.s32.totalorder %s13, 1
    %p147 = por %p145, %p146
    %p148 = scmp.ne.s32.totalorder %s140, %s143
    %p149 = scmp.eq.s32.totalorder %s13, 0
    %p150 = por %p148, %p149
    %p151 = scmp.ne.s32.totalorder %s140, %s143
    %p152 = scmp.eq.s32.totalorder %s18, 1
    %p153 = por %p151, %p152
    %p154 = scmp.ne.s32.totalorder %s143, %s144
    %p155 = scmp.eq.s32.totalorder %s18, 0
    %p156 = por %p154, %p155
    %p157 = scmp.ne.s32.totalorder %s143, %s144
    %p158 = scmp.eq.s32.totalorder %s19, 1
    %p159 = por %p157, %p158
    %p161 = scmp.ne.s32.totalorder %s144, %s160
    %p162 = scmp.eq.s32.totalorder %s19, 0
    %p163 = por %p161, %p162
    %s164 = ssub.s32 %s20, %s32
    %s165 = ssub.s32 %s21, %s28
    %s166 = sor.u32 %s164, %s165
    %p167 = scmp.eq.s32.totalorder %s166, 0
    %s169 = sadd.s32 %s168, 1
    %s170 = scalar_select %p167, %s168, %s169
    %p173 = pneg %p167
    %p174 = scmp.eq.s32.totalorder %s13, 1
    %p175 = por %p173, %p174
    %p176 = scmp.ne.s32.totalorder %s168, %s171
    %p177 = scmp.eq.s32.totalorder %s13, 0
    %p178 = por %p176, %p177
    %p179 = scmp.ne.s32.totalorder %s168, %s171
    %p180 = scmp.eq.s32.totalorder %s18, 1
    %p181 = por %p179, %p180
    %p182 = scmp.ne.s32.totalorder %s171, %s172
    %p183 = scmp.eq.s32.totalorder %s18, 0
    %p184 = por %p182, %p183
    %p185 = scmp.ne.s32.totalorder %s171, %s172
    %p186 = scmp.eq.s32.totalorder %s19, 1
    %p187 = por %p185, %p186
    %p189 = scmp.ne.s32.totalorder %s172, %s188
    %p190 = scmp.eq.s32.totalorder %s19, 0
    %p191 = por %p189, %p190
    %s192 = ssub.s32 %s21, %s28
    %p193 = scmp.eq.s32.totalorder %s192, 0
    %s195 = sadd.s32 %s194, 1
    %s196 = scalar_select %p193, %s194, %s195
    %p199 = pneg %p193
    %p200 = scmp.eq.s32.totalorder %s13, 1
    %p201 = por %p199, %p200
    %p202 = scmp.ne.s32.totalorder %s194, %s197
    %p203 = scmp.eq.s32.totalorder %s13, 0
    %p204 = por %p202, %p203
    %p205 = scmp.ne.s32.totalorder %s194, %s197
    %p206 = scmp.eq.s32.totalorder %s18, 1
    %p207 = por %p205, %p206
    %p208 = scmp.ne.s32.totalorder %s197, %s198
    %p209 = scmp.eq.s32.totalorder %s18, 0
    %p210 = por %p208, %p209
    %p211 = scmp.ne.s32.totalorder %s197, %s198
    %p212 = scmp.eq.s32.totalorder %s19, 1
    %p213 = por %p211, %p212
    %p215 = scmp.ne.s32.totalorder %s198, %s214
    %p216 = scmp.eq.s32.totalorder %s19, 0
    %p217 = por %p215, %p216
    %s218 = ssub.s32 %s20, %s32
    %s219 = ssub.s32 %s21, %s28
    %s220 = sor.u32 %s218, %s219
    %p221 = scmp.eq.s32.totalorder %s220, 0
    %s223 = sadd.s32 %s222, 1
    %s224 = scalar_select %p221, %s222, %s223
    %p227 = pneg %p221
    %p228 = scmp.eq.s32.totalorder %s13, 1
    %p229 = por %p227, %p228
    %p230 = scmp.ne.s32.totalorder %s222, %s225
    %p231 = scmp.eq.s32.totalorder %s13, 0
    %p232 = por %p230, %p231
    %p233 = scmp.ne.s32.totalorder %s222, %s225
    %p234 = scmp.eq.s32.totalorder %s18, 1
    %p235 = por %p233, %p234
    %p236 = scmp.ne.s32.totalorder %s225, %s226
    %p237 = scmp.eq.s32.totalorder %s18, 0
    %p238 = por %p236, %p237
    %p239 = scmp.ne.s32.totalorder %s225, %s226
    %p240 = scmp.eq.s32.totalorder %s19, 1
    %p241 = por %p239, %p240
    %p243 = scmp.ne.s32.totalorder %s226, %s242
    %p244 = scmp.eq.s32.totalorder %s19, 0
    %p245 = por %p243, %p244
    %p246 = scmp.le.s32.totalorder 1, %s13
    %p247 = scmp.lt.s32.totalorder %s13, 3
    %p248 = pnand %p246, %p247
    %p249 = pneg %p248
    // Predicated region
    $region9: #{strided_eff_dwise.5} parent=5 // pred_check
      _
    $region10: #{strided_eff_dwise.5} parent=5 // pred_check_branch
      %251 = sbr.rel (%p248) target = $region12
    $region11: #{strided_eff_dwise.5} parent=5 // pred_region
      %s252 = ssub.s32 %s13, 1
      // Predicated region
      $region13: #{strided_eff_dwise.5} parent=11 // pred_check
        %p253 = pneg %p46
      $region14: #{strided_eff_dwise.5} parent=11 // pred_check_branch
        %255 = sbr.rel (%p253) target = $region16
      $region15: #{strided_eff_dwise.5} parent=11 // pred_region
        _
      $region16: #{strided_eff_dwise.5} parent=11 // pred_fallthru
        _
      // Predicated region
      $region17: #{strided_eff_dwise.5} parent=11 // pred_check
        %p256 = pneg %p128
      $region18: #{strided_eff_dwise.5} parent=11 // pred_check_branch
        %258 = sbr.rel (%p256) target = $region20
      $region19: #{strided_eff_dwise.5} parent=11 // pred_region
        %p259 = scmp.lt.s32.totalorder %s23, 0
        %s260 = scalar_select %p259, %s23, 0
        %s261 = smul.addr %s260, 4
        %s262 = scalar_lea.vmem %s3, %s261
      $region20: #{strided_eff_dwise.5} parent=11 // pred_fallthru
        _
      // Predicated region
      $region21: #{strided_eff_dwise.5} parent=11 // pred_check
        %p263 = pneg %p210
      $region22: #{strided_eff_dwise.5} parent=11 // pred_check_branch
        %265 = sbr.rel (%p263) target = $region24
      $region23: #{strided_eff_dwise.5} parent=11 // pred_region
        %p266 = scmp.lt.s32.totalorder %s23, 0
        %s267 = scalar_select %p266, %s23, 0
        %s268 = smul.addr %s267, 4
        %s269 = scalar_lea.vmem %s6, %s268
      $region24: #{strided_eff_dwise.5} parent=11 // pred_fallthru
        _
    $region12: #{strided_eff_dwise.5} parent=5 // pred_fallthru
      _
    %p270 = scmp.lt.s32.totalorder %s13, 2
    // Predicated region
    $region25: #{strided_eff_dwise.5} parent=5 // pred_check
      %p271 = pneg %p270
    $region26: #{strided_eff_dwise.5} parent=5 // pred_check_branch
      %273 = sbr.rel (%p271) target = $region28
    $region27: #{strided_eff_dwise.5} parent=5 // pred_region
      // Predicated region
      $region29: #{strided_eff_dwise.5} parent=27 // pred_check
        %p274 = pneg %p68
      $region30: #{strided_eff_dwise.5} parent=27 // pred_check_branch
        %276 = sbr.rel (%p274) target = $region32
      $region31: #{strided_eff_dwise.5} parent=27 // pred_region
        %p277 = scmp.lt.s32.totalorder %s20, 1
        %s278 = scalar_select %p277, %s20, 1
        %p279 = scmp.lt.s32.totalorder %s21, 0
        %s280 = scalar_select %p279, %s21, 0
        %s281 = sadd.s32 %s280, %s278
        %s282 = smul.addr %s281, 4
        %s283 = scalar_lea.vmem %s1, %s282
      $region32: #{strided_eff_dwise.5} parent=27 // pred_fallthru
        _
      // Predicated region
      $region33: #{strided_eff_dwise.5} parent=27 // pred_check
        %p284 = pneg %p96
      $region34: #{strided_eff_dwise.5} parent=27 // pred_check_branch
        %286 = sbr.rel (%p284) target = $region36
      $region35: #{strided_eff_dwise.5} parent=27 // pred_region
        %p287 = scmp.lt.s32.totalorder %s20, 1
        %s288 = scalar_select %p287, %s20, 1
        %p289 = scmp.lt.s32.totalorder %s21, 0
        %s290 = scalar_select %p289, %s21, 0
        %s291 = sadd.s32 %s290, %s288
        %s292 = smul.addr %s291, 4
        %s293 = scalar_lea.vmem %s2, %s292
      $region36: #{strided_eff_dwise.5} parent=27 // pred_fallthru
        _
      // Predicated region
      $region37: #{strided_eff_dwise.5} parent=27 // pred_check
        %p294 = pneg %p150
      $region38: #{strided_eff_dwise.5} parent=27 // pred_check_branch
        %296 = sbr.rel (%p294) target = $region40
      $region39: #{strided_eff_dwise.5} parent=27 // pred_region
        %p297 = scmp.lt.s32.totalorder %s20, 1
        %s298 = scalar_select %p297, %s20, 1
        %p299 = scmp.lt.s32.totalorder %s21, 0
        %s300 = scalar_select %p299, %s21, 0
        %s301 = sadd.s32 %s300, %s298
        %s302 = smul.addr %s301, 4
        %s303 = scalar_lea.vmem %s4, %s302
      $region40: #{strided_eff_dwise.5} parent=27 // pred_fallthru
        _
      // Predicated region
      $region41: #{strided_eff_dwise.5} parent=27 // pred_check
        %p304 = pneg %p178
      $region42: #{strided_eff_dwise.5} parent=27 // pred_check_branch
        %306 = sbr.rel (%p304) target = $region44
      $region43: #{strided_eff_dwise.5} parent=27 // pred_region
        %p307 = scmp.lt.s32.totalorder %s20, 1
        %s308 = scalar_select %p307, %s20, 1
        %p309 = scmp.lt.s32.totalorder %s21, 0
        %s310 = scalar_select %p309, %s21, 0
        %s311 = sadd.s32 %s310, %s308
        %s312 = smul.addr %s311, 4
        %s313 = scalar_lea.vmem %s5, %s312
      $region44: #{strided_eff_dwise.5} parent=27 // pred_fallthru
        _
    $region28: #{strided_eff_dwise.5} parent=5 // pred_fallthru
      _
    %p314 = scmp.le.s32.totalorder 1, %s13
    %p315 = scmp.lt.s32.totalorder %s13, 3
    %p316 = pnand %p314, %p315
    %p317 = pneg %p316
    // Predicated region
    $region45: #{strided_eff_dwise.5} parent=5 // pred_check
      _
    $region46: #{strided_eff_dwise.5} parent=5 // pred_check_branch
      %319 = sbr.rel (%p316) target = $region48
    $region47: #{strided_eff_dwise.5} parent=5 // pred_region
      %s320 = ssub.s32 %s13, 1
      %p321 = pneg %p46
      %p322 = pneg %p43
      %p323 = scmp.lt.s32.totalorder %s22, 1
      %s324 = scalar_select %p323, %s22, 1
      %p325 = scmp.lt.s32.totalorder %s23, 0
      %s326 = scalar_select %p325, %s23, 0
      %s327 = sadd.s32 %s326, %s324
      %s328 = smul.addr %s327, 4
      %s329 = scalar_lea.vmem %s1, %s328
      %p330 = pneg %p74
      %p331 = pneg %p71
      %p332 = scmp.lt.s32.totalorder %s22, 1
      %s333 = scalar_select %p332, %s22, 1
      %p334 = scmp.lt.s32.totalorder %s23, 0
      %s335 = scalar_select %p334, %s23, 0
      %s336 = sadd.s32 %s335, %s333
      %s337 = smul.addr %s336, 4
      %s338 = scalar_lea.vmem %s2, %s337
      %p339 = pneg %p102
      %p340 = pneg %p99
      %p341 = scmp.lt.s32.totalorder %s23, 0
      %s342 = scalar_select %p341, %s23, 0
      %s343 = smul.addr %s342, 4
      %s344 = scalar_lea.vmem %s3, %s343
      %p345 = pneg %p128
      %p346 = pneg %p125
      %p347 = scmp.lt.s32.totalorder %s22, 1
      %s348 = scalar_select %p347, %s22, 1
      %p349 = scmp.lt.s32.totalorder %s23, 0
      %s350 = scalar_select %p349, %s23, 0
      %s351 = sadd.s32 %s350, %s348
      %s352 = smul.addr %s351, 4
      %s353 = scalar_lea.vmem %s4, %s352
      %p354 = pneg %p156
      %p355 = pneg %p153
      %p356 = scmp.lt.s32.totalorder %s22, 1
      %s357 = scalar_select %p356, %s22, 1
      %p358 = scmp.lt.s32.totalorder %s23, 0
      %s359 = scalar_select %p358, %s23, 0
      %s360 = sadd.s32 %s359, %s357
      %s361 = smul.addr %s360, 4
      %s362 = scalar_lea.vmem %s5, %s361
      %p363 = pneg %p184
      %p364 = pneg %p181
      %p365 = scmp.lt.s32.totalorder %s23, 0
      %s366 = scalar_select %p365, %s23, 0
      %s367 = smul.addr %s366, 4
      %s368 = scalar_lea.vmem %s6, %s367
      %p369 = pneg %p210
      %p370 = pneg %p207
      %p371 = pneg %p238
      %p372 = pneg %p235
      %p373 = scmp.lt.s32.totalorder %s22, 1
      %s374 = scalar_select %p373, %s22, 1
      %p375 = scmp.lt.s32.totalorder %s23, 0
      %s376 = scalar_select %p375, %s23, 0
      %s377 = smul.addr %s374, 2
      %s378 = sadd.s32 %s376, %s377
      %s379 = smul.addr %s378, 4
      %s380 = scalar_lea.vmem %s7, %s379
      %p381 = scmp.lt.s32.totalorder %s22, 1
      %s382 = scalar_select %p381, %s22, 1
      %p383 = scmp.lt.s32.totalorder %s23, 0
      %s384 = scalar_select %p383, %s23, 0
      %s385 = sadd.s32 %s384, %s382
      %s386 = smul.addr %s385, 4
      %s387 = scalar_lea.vmem %s1, %s386
      %p388 = scmp.lt.s32.totalorder %s22, 1
      %s389 = scalar_select %p388, %s22, 1
      %p390 = scmp.lt.s32.totalorder %s23, 0
      %s391 = scalar_select %p390, %s23, 0
      %s392 = sadd.s32 %s391, %s389
      %s393 = smul.addr %s392, 4
      %s394 = scalar_lea.vmem %s2, %s393
      %p395 = scmp.lt.s32.totalorder %s23, 0
      %s396 = scalar_select %p395, %s23, 0
      %s397 = smul.addr %s396, 4
      %s398 = scalar_lea.vmem %s3, %s397
      %p399 = scmp.lt.s32.totalorder %s22, 1
      %s400 = scalar_select %p399, %s22, 1
      %p401 = scmp.lt.s32.totalorder %s23, 0
      %s402 = scalar_select %p401, %s23, 0
      %s403 = sadd.s32 %s402, %s400
      %s404 = smul.addr %s403, 4
      %s405 = scalar_lea.vmem %s4, %s404
      %p406 = scmp.lt.s32.totalorder %s22, 1
      %s407 = scalar_select %p406, %s22, 1
      %p408 = scmp.lt.s32.totalorder %s23, 0
      %s409 = scalar_select %p408, %s23, 0
      %s410 = sadd.s32 %s409, %s407
      %s411 = smul.addr %s410, 4
      %s412 = scalar_lea.vmem %s5, %s411
      %p413 = scmp.lt.s32.totalorder %s23, 0
      %s414 = scalar_select %p413, %s23, 0
      %s415 = smul.addr %s414, 4
      %s416 = scalar_lea.vmem %s6, %s415
      %p417 = scmp.lt.s32.totalorder %s22, 1
      %s418 = scalar_select %p417, %s22, 1
      %p419 = scmp.lt.s32.totalorder %s23, 0
      %s420 = scalar_select %p419, %s23, 0
      %s421 = smul.addr %s418, 2
      %s422 = sadd.s32 %s420, %s421
      %s423 = smul.addr %s422, 4
      %s424 = scalar_lea.vmem %s7, %s423
      %v425 = vld [vmem:[%s0] sm:$0x3]
      %v426 = vld [vmem:[%s387] sm:$0xf]
      %s427 = scalar_lea.vmem %s398, 16
      %v428 = vld [vmem:[%s427] sm:$0xf]
      %430 = vset.pattern.permute.xlu0 0
      %431 = vperm.xlu0 %430, %v428
      %v432 = vpop.permute.xlu0 %431
      %v434 = vmul.f32 %v426, %v432
      %vm435 = vcmask 1048064
      %436 = vrot.lane.b32.xlu0 %v426, 64
      %v437 = vpop.permute.xlu0 %436
      %v438 = vsel %vm435, %v437, %v426
      %439 = vrot.lane.b32.xlu0 %v438, 64
      %v440 = vpop.permute.xlu0 %439
      %v441 = vsel %vm435, %v440, %v426
      %vm442 = vcmp.ge.s32.totalorder %v425, 1
      %v443 = vsel %vm442, 1, 0
      %v444 = vrot.slane %v443, 1
      %vm445 = vcmp.ne.s32.totalorder %v444, 0
      %vm446 = vmand %vm442, %vm445
      %v447 = vsel %vm446, 1, 0
      %v448 = vlaneseq
      %v449 = vshrl.u32 %v448, 7
      %v450 = vsub.s32 0, %v449
      %v451 = vrot.slane %v447, %v450
      %vm452 = vcmp.eq.s32.totalorder %v451, 1
      %454 = vrot.lane.b32.xlu0 %v441, 73
      %v455 = vpop.permute.xlu0 %454
      %v457 = vsel %vm452, %v455, 0.0
      %v458 = vld [vmem:[%s398] sm:$0xf]
      %460 = vset.pattern.permute.xlu0 0
      %461 = vperm.xlu0 %460, %v458
      %v462 = vpop.permute.xlu0 %461
      %v464 = vmul.f32 %v457, %v462
      %v465 = vadd.f32 %v434, %v464
      %v466 = vlaneseq
      %v467 = vshrl.u32 %v466, 7
      %v468 = vsub.s32 0, %v467
      %v469 = vrot.slane %v443, %v468
      %vm470 = vcmp.eq.s32.totalorder %v469, 1
      %471 = vrot.lane.b32.xlu0 %v441, 72
      %v472 = vpop.permute.xlu0 %471
      %v474 = vsel %vm470, %v472, 0.0
      %s475 = scalar_lea.vmem %s398, 4
      %v476 = vld [vmem:[%s475] sm:$0xf]
      %478 = vset.pattern.permute.xlu0 0
      %479 = vperm.xlu0 %478, %v476
      %v480 = vpop.permute.xlu0 %479
      %v482 = vmul.f32 %v474, %v480
      %v483 = vadd.f32 %v465, %v482
      %vm484 = vcmp.le.s32.totalorder %v425, 6
      %v485 = vsel %vm484, 1, 0
      %v486 = vrot.slane %v485, 1
      %vm487 = vcmp.ne.s32.totalorder %v486, 0
      %vm488 = vmand %vm442, %vm487
      %v489 = vsel %vm488, 1, 0
      %v490 = vlaneseq
      %v491 = vshrl.u32 %v490, 7
      %v492 = vsub.s32 0, %v491
      %v493 = vrot.slane %v489, %v492
      %vm494 = vcmp.eq.s32.totalorder %v493, 1
      %495 = vrot.lane.b32.xlu0 %v441, 71
      %v496 = vpop.permute.xlu0 %495
      %v498 = vsel %vm494, %v496, 0.0
      %s499 = scalar_lea.vmem %s398, 8
      %v500 = vld [vmem:[%s499] sm:$0xf]
      %502 = vset.pattern.permute.xlu0 0
      %503 = vperm.xlu0 %502, %v500
      %v504 = vpop.permute.xlu0 %503
      %v506 = vmul.f32 %v498, %v504
      %v507 = vadd.f32 %v483, %v506
      %v508 = vlaneseq
      %v509 = vshrl.u32 %v508, 7
      %v510 = vsub.s32 1, %v509
      %v511 = vrot.slane %v443, %v510
      %vm512 = vcmp.eq.s32.totalorder %v511, 1
      %513 = vrot.lane.b32.xlu0 %v441, 65
      %v514 = vpop.permute.xlu0 %513
      %v516 = vsel %vm512, %v514, 0.0
      %s517 = scalar_lea.vmem %s398, 12
      %v518 = vld [vmem:[%s517] sm:$0xf]
      %520 = vset.pattern.permute.xlu0 0
      %521 = vperm.xlu0 %520, %v518
      %v522 = vpop.permute.xlu0 %521
      %v524 = vmul.f32 %v516, %v522
      %v525 = vadd.f32 %v507, %v524
      %v526 = vlaneseq
      %v527 = vshrl.u32 %v526, 7
      %v528 = vsub.s32 1, %v527
      %v529 = vrot.slane %v485, %v528
      %vm530 = vcmp.eq.s32.totalorder %v529, 1
      %531 = vrot.lane.b32.xlu0 %v441, 127
      %v532 = vpop.permute.xlu0 %531
      %v534 = vsel %vm530, %v532, 0.0
      %s535 = scalar_lea.vmem %s398, 20
      %v536 = vld [vmem:[%s535] sm:$0xf]
      %538 = vset.pattern.permute.xlu0 0
      %539 = vperm.xlu0 %538, %v536
      %v540 = vpop.permute.xlu0 %539
      %v542 = vmul.f32 %v534, %v540
      %v543 = vadd.f32 %v525, %v542
      %vm544 = vmand %vm484, %vm445
      %v545 = vsel %vm544, 1, 0
      %v546 = vlaneseq
      %v547 = vshrl.u32 %v546, 7
      %v548 = vsub.s32 0, %v547
      %v549 = vrot.slane %v545, %v548
      %vm550 = vcmp.eq.s32.totalorder %v549, 1
      %551 = vrot.lane.b32.xlu0 %v441, 121
      %v552 = vpop.permute.xlu0 %551
      %v554 = vsel %vm550, %v552, 0.0
      %s555 = scalar_lea.vmem %s398, 24
      %v556 = vld [vmem:[%s555] sm:$0xf]
      %558 = vset.pattern.permute.xlu0 0
      %559 = vperm.xlu0 %558, %v556
      %v560 = vpop.permute.xlu0 %559
      %v562 = vmul.f32 %v554, %v560
      %v563 = vadd.f32 %v543, %v562
      %v564 = vlaneseq
      %v565 = vshrl.u32 %v564, 7
      %v566 = vsub.s32 0, %v565
      %v567 = vrot.slane %v485, %v566
      %vm568 = vcmp.eq.s32.totalorder %v567, 1
      %569 = vrot.lane.b32.xlu0 %v441, 120
      %v570 = vpop.permute.xlu0 %569
      %v572 = vsel %vm568, %v570, 0.0
      %s573 = scalar_lea.vmem %s398, 28
      %v574 = vld [vmem:[%s573] sm:$0xf]
      %576 = vset.pattern.permute.xlu0 0
      %577 = vperm.xlu0 %576, %v574
      %v578 = vpop.permute.xlu0 %577
      %v580 = vmul.f32 %v572, %v578
      %v581 = vadd.f32 %v563, %v580
      %vm582 = vmand %vm484, %vm487
      %v583 = vsel %vm582, 1, 0
      %v584 = vlaneseq
      %v585 = vshrl.u32 %v584, 7
      %v586 = vsub.s32 0, %v585
      %v587 = vrot.slane %v583, %v586
      %vm588 = vcmp.eq.s32.totalorder %v587, 1
      %589 = vrot.lane.b32.xlu0 %v441, 119
      %v590 = vpop.permute.xlu0 %589
      %v592 = vsel %vm588, %v590, 0.0
      %s593 = scalar_lea.vmem %s398, 32
      %v594 = vld [vmem:[%s593] sm:$0xf]
      %596 = vset.pattern.permute.xlu0 0
      %597 = vperm.xlu0 %596, %v594
      %v598 = vpop.permute.xlu0 %597
      %v600 = vmul.f32 %v592, %v598
      %v601 = vadd.f32 %v581, %v600
      %v602 = vld [vmem:[%s405] sm:$0xf]
      %v603 = vld [vmem:[%s412] sm:$0xf]
      %v604 = vld [vmem:[%s416] sm:$0xf]
      %606 = vset.pattern.permute.xlu0 0
      %607 = vperm.xlu0 %606, %v602
      %v608 = vpop.permute.xlu0 %607
      %v610 = vmul.f32 %v601, %v608
      %612 = vset.pattern.permute.xlu0 0
      %613 = vperm.xlu0 %612, %v603
      %v614 = vpop.permute.xlu0 %613
      %v616 = vadd.f32 %v610, %v614
      %vm617 = vcmp.gt.f32.partialorder %v616, 0.0
      %619 = vset.pattern.permute.xlu0 0
      %620 = vperm.xlu0 %619, %v604
      %v621 = vpop.permute.xlu0 %620
      %v623 = vmul.f32 %v621, %v616
      %v624 = vsel %vm617, %v616, %v623
      %v625 = vld [vmem:[%s394] sm:$0xf]
      %vm626 = vcmask 519168
      %627 = vst.msk [vmem:[%s424] sm:$0xf] %vm626, %v625
      %s628 = scalar_lea.vmem %s424, 4
      %629 = vst.msk [vmem:[%s628] sm:$0xf] %vm626, %v624
      %p630 = scmp.lt.s32.totalorder %s22, 1
      %s631 = scalar_select %p630, %s22, 1
      %p632 = scmp.lt.s32.totalorder %s23, 0
      %s633 = scalar_select %p632, %s23, 0
      %s634 = smul.addr %s631, 2
      %s635 = sadd.s32 %s633, %s634
      %s636 = smul.addr %s635, 4
      %s637 = scalar_lea.vmem %s7, %s636
      // Predicated region
      $region49: #{strided_eff_dwise.5} parent=47 // pred_check
        %p638 = pneg %p235
      $region50: #{strided_eff_dwise.5} parent=47 // pred_check_branch
        %640 = sbr.rel (%p638) target = $region52
      $region51: #{strided_eff_dwise.5} parent=47 // pred_region
        _
      $region52: #{strided_eff_dwise.5} parent=47 // pred_fallthru
        _
    $region48: #{strided_eff_dwise.5} parent=5 // pred_fallthru
      _
    %p641 = scmp.le.s32.totalorder 2, %s13
    // Predicated region
    $region53: #{strided_eff_dwise.5} parent=5 // pred_check
      %p642 = pneg %p641
    $region54: #{strided_eff_dwise.5} parent=5 // pred_check_branch
      %644 = sbr.rel (%p642) target = $region56
    $region55: #{strided_eff_dwise.5} parent=5 // pred_region
      %s645 = ssub.s32 %s13, 2
      // Predicated region
      $region57: #{strided_eff_dwise.5} parent=55 // pred_check
        %p646 = pneg %p241
      $region58: #{strided_eff_dwise.5} parent=55 // pred_check_branch
        %648 = sbr.rel (%p646) target = $region60
      $region59: #{strided_eff_dwise.5} parent=55 // pred_region
        %p649 = scmp.lt.s32.totalorder %s24, 1
        %s650 = scalar_select %p649, %s24, 1
        %p651 = scmp.lt.s32.totalorder %s25, 0
        %s652 = scalar_select %p651, %s25, 0
        %s653 = smul.addr %s650, 2
        %s654 = sadd.s32 %s652, %s653
        %s655 = smul.addr %s654, 4
        %s656 = scalar_lea.vmem %s7, %s655
      $region60: #{strided_eff_dwise.5} parent=55 // pred_fallthru
        _
    $region56: #{strided_eff_dwise.5} parent=5 // pred_fallthru
      _
  $region6: #{strided_eff_dwise.5} parent=0 // loop_footer
    %s17 = sadd.s32 1, %s13
  $region7: #{strided_eff_dwise.5} parent=0 // loop_footer_branch
    %12 = sbr.rel target = $region3
  $region8: #{strided_eff_dwise.5} parent=0 // loop_exit
    _

// kernel: strided_eff_dwise.3
$region0: #{strided_eff_dwise.3}
  #allocation0 [shape = 'u32[]', space=smem, size = 0x4, offset = 0x4, fixed_abs, tag = 'smem constant byte address 0x4 - core index']
  #allocation1 [shape = 'u32[144,128]{1,0:T(1,128)}', space=vmem, size = 0x12000, scoped, tag = 'internal scratch']
  %s0 = inlined_call_operand.vmem [shape: s32[2,64], index: 0, kind: input, shape index: {}]
  %s1 = inlined_call_operand.vmem [shape: f32[2,4,4,64], index: 1, kind: input, shape index: {}]
  %s2 = inlined_call_operand.vmem [shape: f32[3,3,4,1], index: 2, kind: input, shape index: {}]
  %s3 = inlined_call_operand.vmem [shape: f32[4,1], index: 3, kind: input, shape index: {}]
  %s4 = inlined_call_operand.vmem [shape: f32[4,1], index: 4, kind: input, shape index: {}]
  %s5 = inlined_call_operand.vmem [shape: f32[4,1], index: 5, kind: input, shape index: {}]
  %s6 = inlined_call_operand.vmem [shape: f32[2,4,64], index: 6, kind: output, shape index: {}]
  %s7 = sld [smem:[#allocation0]]
  $region57: #{strided_eff_dwise.3} parent=0
    _
  %s9 = ssub.s32 1, %s7
  %s10 = scalar_select 0, %s9, %s7
  loop: start=0, step=1, limit=4
  $region2: #{strided_eff_dwise.3} parent=0 // loop_pre_header
    _
  $region3: #{strided_eff_dwise.3} parent=0 // loop_header
    %s12 = sphi 0, %s16
    %p13 = scmp.ge.s32.totalorder %s12, 4
    %s19 = sphi 0, %s31
    %s20 = sphi 0, %s27
    %s21 = sphi 0, %s19
    %s22 = sphi 0, %s20
    %s23 = sphi 0, %s21
    %s24 = sphi 0, %s22
    %s32 = sphi 0, %s32
    %s34 = sphi 0, %s32
    %s35 = sphi 0, %s34
    %s49 = sphi 0, %s35
    %s57 = sphi 0, %s59
    %s60 = sphi 0, %s57
    %s61 = sphi 0, %s60
    %s77 = sphi 0, %s61
    %s83 = sphi 0, %s85
    %s86 = sphi 0, %s83
    %s87 = sphi 0, %s86
    %s103 = sphi 0, %s87
    %s109 = sphi 0, %s111
    %s112 = sphi 0, %s109
    %s113 = sphi 0, %s112
    %s129 = sphi 0, %s113
    %s135 = sphi 0, %s137
    %s138 = sphi 0, %s135
    %s139 = sphi 0, %s138
    %s155 = sphi 0, %s139
    %s161 = sphi 0, %s163
    %s164 = sphi 0, %s161
    %s165 = sphi 0, %s164
    %s181 = sphi 0, %s165
    %s189 = sphi 0, %s191
    %s192 = sphi 0, %s189
    %s193 = sphi 0, %s192
    %s209 = sphi 0, %s193
  $region4: #{strided_eff_dwise.3} parent=0 // loop_header_branch
    %15 = sbr.rel (%p13) target = $region8
  $region5: #{strided_eff_dwise.3} parent=0 // loop_body
    %s17 = ssub.s32 %s12, 1
    %s18 = ssub.s32 %s12, 2
    %s25 = sadd.s32 1, %s20
    %p26 = scmp.ge.s32.totalorder %s25, 1
    %s27 = scalar_select %p26, 0, %s25
    %s28 = sadd.s32 1, %s19
    %s29 = scalar_select %p26, %s28, %s19
    %p30 = scmp.ge.s32.totalorder %s29, 2
    %s31 = scalar_select %p30, 0, %s29
    %s33 = sadd.s32 %s32, 1
    %p36 = scmp.eq.s32.totalorder %s12, 1
    %p37 = scmp.ne.s32.totalorder %s32, %s34
    %p38 = scmp.eq.s32.totalorder %s12, 0
    %p39 = por %p37, %p38
    %p40 = scmp.ne.s32.totalorder %s32, %s34
    %p41 = scmp.eq.s32.totalorder %s17, 1
    %p42 = por %p40, %p41
    %p43 = scmp.ne.s32.totalorder %s34, %s35
    %p44 = scmp.eq.s32.totalorder %s17, 0
    %p45 = por %p43, %p44
    %p46 = scmp.ne.s32.totalorder %s34, %s35
    %p47 = scmp.eq.s32.totalorder %s18, 1
    %p48 = por %p46, %p47
    %p50 = scmp.ne.s32.totalorder %s35, %s49
    %p51 = scmp.eq.s32.totalorder %s18, 0
    %p52 = por %p50, %p51
    %s53 = ssub.s32 %s19, %s31
    %s54 = ssub.s32 %s20, %s27
    %s55 = sor.u32 %s53, %s54
    %p56 = scmp.eq.s32.totalorder %s55, 0
    %s58 = sadd.s32 %s57, 1
    %s59 = scalar_select %p56, %s57, %s58
    %p62 = pneg %p56
    %p63 = scmp.eq.s32.totalorder %s12, 1
    %p64 = por %p62, %p63
    %p65 = scmp.ne.s32.totalorder %s57, %s60
    %p66 = scmp.eq.s32.totalorder %s12, 0
    %p67 = por %p65, %p66
    %p68 = scmp.ne.s32.totalorder %s57, %s60
    %p69 = scmp.eq.s32.totalorder %s17, 1
    %p70 = por %p68, %p69
    %p71 = scmp.ne.s32.totalorder %s60, %s61
    %p72 = scmp.eq.s32.totalorder %s17, 0
    %p73 = por %p71, %p72
    %p74 = scmp.ne.s32.totalorder %s60, %s61
    %p75 = scmp.eq.s32.totalorder %s18, 1
    %p76 = por %p74, %p75
    %p78 = scmp.ne.s32.totalorder %s61, %s77
    %p79 = scmp.eq.s32.totalorder %s18, 0
    %p80 = por %p78, %p79
    %s81 = ssub.s32 %s20, %s27
    %p82 = scmp.eq.s32.totalorder %s81, 0
    %s84 = sadd.s32 %s83, 1
    %s85 = scalar_select %p82, %s83, %s84
    %p88 = pneg %p82
    %p89 = scmp.eq.s32.totalorder %s12, 1
    %p90 = por %p88, %p89
    %p91 = scmp.ne.s32.totalorder %s83, %s86
    %p92 = scmp.eq.s32.totalorder %s12, 0
    %p93 = por %p91, %p92
    %p94 = scmp.ne.s32.totalorder %s83, %s86
    %p95 = scmp.eq.s32.totalorder %s17, 1
    %p96 = por %p94, %p95
    %p97 = scmp.ne.s32.totalorder %s86, %s87
    %p98 = scmp.eq.s32.totalorder %s17, 0
    %p99 = por %p97, %p98
    %p100 = scmp.ne.s32.totalorder %s86, %s87
    %p101 = scmp.eq.s32.totalorder %s18, 1
    %p102 = por %p100, %p101
    %p104 = scmp.ne.s32.totalorder %s87, %s103
    %p105 = scmp.eq.s32.totalorder %s18, 0
    %p106 = por %p104, %p105
    %s107 = ssub.s32 %s20, %s27
    %p108 = scmp.eq.s32.totalorder %s107, 0
    %s110 = sadd.s32 %s109, 1
    %s111 = scalar_select %p108, %s109, %s110
    %p114 = pneg %p108
    %p115 = scmp.eq.s32.totalorder %s12, 1
    %p116 = por %p114, %p115
    %p117 = scmp.ne.s32.totalorder %s109, %s112
    %p118 = scmp.eq.s32.totalorder %s12, 0
    %p119 = por %p117, %p118
    %p120 = scmp.ne.s32.totalorder %s109, %s112
    %p121 = scmp.eq.s32.totalorder %s17, 1
    %p122 = por %p120, %p121
    %p123 = scmp.ne.s32.totalorder %s112, %s113
    %p124 = scmp.eq.s32.totalorder %s17, 0
    %p125 = por %p123, %p124
    %p126 = scmp.ne.s32.totalorder %s112, %s113
    %p127 = scmp.eq.s32.totalorder %s18, 1
    %p128 = por %p126, %p127
    %p130 = scmp.ne.s32.totalorder %s113, %s129
    %p131 = scmp.eq.s32.totalorder %s18, 0
    %p132 = por %p130, %p131
    %s133 = ssub.s32 %s20, %s27
    %p134 = scmp.eq.s32.totalorder %s133, 0
    %s136 = sadd.s32 %s135, 1
    %s137 = scalar_select %p134, %s135, %s136
    %p140 = pneg %p134
    %p141 = scmp.eq.s32.totalorder %s12, 1
    %p142 = por %p140, %p141
    %p143 = scmp.ne.s32.totalorder %s135, %s138
    %p144 = scmp.eq.s32.totalorder %s12, 0
    %p145 = por %p143, %p144
    %p146 = scmp.ne.s32.totalorder %s135, %s138
    %p147 = scmp.eq.s32.totalorder %s17, 1
    %p148 = por %p146, %p147
    %p149 = scmp.ne.s32.totalorder %s138, %s139
    %p150 = scmp.eq.s32.totalorder %s17, 0
    %p151 = por %p149, %p150
    %p152 = scmp.ne.s32.totalorder %s138, %s139
    %p153 = scmp.eq.s32.totalorder %s18, 1
    %p154 = por %p152, %p153
    %p156 = scmp.ne.s32.totalorder %s139, %s155
    %p157 = scmp.eq.s32.totalorder %s18, 0
    %p158 = por %p156, %p157
    %s159 = ssub.s32 %s20, %s27
    %p160 = scmp.eq.s32.totalorder %s159, 0
    %s162 = sadd.s32 %s161, 1
    %s163 = scalar_select %p160, %s161, %s162
    %p166 = pneg %p160
    %p167 = scmp.eq.s32.totalorder %s12, 1
    %p168 = por %p166, %p167
    %p169 = scmp.ne.s32.totalorder %s161, %s164
    %p170 = scmp.eq.s32.totalorder %s12, 0
    %p171 = por %p169, %p170
    %p172 = scmp.ne.s32.totalorder %s161, %s164
    %p173 = scmp.eq.s32.totalorder %s17, 1
    %p174 = por %p172, %p173
    %p175 = scmp.ne.s32.totalorder %s164, %s165
    %p176 = scmp.eq.s32.totalorder %s17, 0
    %p177 = por %p175, %p176
    %p178 = scmp.ne.s32.totalorder %s164, %s165
    %p179 = scmp.eq.s32.totalorder %s18, 1
    %p180 = por %p178, %p179
    %p182 = scmp.ne.s32.totalorder %s165, %s181
    %p183 = scmp.eq.s32.totalorder %s18, 0
    %p184 = por %p182, %p183
    %s185 = ssub.s32 %s19, %s31
    %s186 = ssub.s32 %s20, %s27
    %s187 = sor.u32 %s185, %s186
    %p188 = scmp.eq.s32.totalorder %s187, 0
    %s190 = sadd.s32 %s189, 1
    %s191 = scalar_select %p188, %s189, %s190
    %p194 = pneg %p188
    %p195 = scmp.eq.s32.totalorder %s12, 1
    %p196 = por %p194, %p195
    %p197 = scmp.ne.s32.totalorder %s189, %s192
    %p198 = scmp.eq.s32.totalorder %s12, 0
    %p199 = por %p197, %p198
    %p200 = scmp.ne.s32.totalorder %s189, %s192
    %p201 = scmp.eq.s32.totalorder %s17, 1
    %p202 = por %p200, %p201
    %p203 = scmp.ne.s32.totalorder %s192, %s193
    %p204 = scmp.eq.s32.totalorder %s17, 0
    %p205 = por %p203, %p204
    %p206 = scmp.ne.s32.totalorder %s192, %s193
    %p207 = scmp.eq.s32.totalorder %s18, 1
    %p208 = por %p206, %p207
    %p210 = scmp.ne.s32.totalorder %s193, %s209
    %p211 = scmp.eq.s32.totalorder %s18, 0
    %p212 = por %p210, %p211
    %p213 = scmp.le.s32.totalorder 1, %s12
    %p214 = scmp.lt.s32.totalorder %s12, 3
    %p215 = pnand %p213, %p214
    %p216 = pneg %p215
    // Predicated region
    $region9: #{strided_eff_dwise.3} parent=5 // pred_check
      _
    $region10: #{strided_eff_dwise.3} parent=5 // pred_check_branch
      %218 = sbr.rel (%p215) target = $region12
    $region11: #{strided_eff_dwise.3} parent=5 // pred_region
      %s219 = ssub.s32 %s12, 1
      // Predicated region
      $region13: #{strided_eff_dwise.3} parent=11 // pred_check
        %p220 = pneg %p45
      $region14: #{strided_eff_dwise.3} parent=11 // pred_check_branch
        %222 = sbr.rel (%p220) target = $region16
      $region15: #{strided_eff_dwise.3} parent=11 // pred_region
        _
      $region16: #{strided_eff_dwise.3} parent=11 // pred_fallthru
        _
      // Predicated region
      $region17: #{strided_eff_dwise.3} parent=11 // pred_check
        %p223 = pneg %p99
      $region18: #{strided_eff_dwise.3} parent=11 // pred_check_branch
        %225 = sbr.rel (%p223) target = $region20
      $region19: #{strided_eff_dwise.3} parent=11 // pred_region
        %p226 = scmp.lt.s32.totalorder %s22, 0
        %s227 = scalar_select %p226, %s22, 0
        %s228 = smul.addr %s227, 4
        %s229 = scalar_lea.vmem %s2, %s228
      $region20: #{strided_eff_dwise.3} parent=11 // pred_fallthru
        _
      // Predicated region
      $region21: #{strided_eff_dwise.3} parent=11 // pred_check
        %p230 = pneg %p125
      $region22: #{strided_eff_dwise.3} parent=11 // pred_check_branch
        %232 = sbr.rel (%p230) target = $region24
      $region23: #{strided_eff_dwise.3} parent=11 // pred_region
        %p233 = scmp.lt.s32.totalorder %s22, 0
        %s234 = scalar_select %p233, %s22, 0
        %s235 = smul.addr %s234, 4
        %s236 = scalar_lea.vmem %s3, %s235
      $region24: #{strided_eff_dwise.3} parent=11 // pred_fallthru
        _
      // Predicated region
      $region25: #{strided_eff_dwise.3} parent=11 // pred_check
        %p237 = pneg %p151
      $region26: #{strided_eff_dwise.3} parent=11 // pred_check_branch
        %239 = sbr.rel (%p237) target = $region28
      $region27: #{strided_eff_dwise.3} parent=11 // pred_region
        %p240 = scmp.lt.s32.totalorder %s22, 0
        %s241 = scalar_select %p240, %s22, 0
        %s242 = smul.addr %s241, 4
        %s243 = scalar_lea.vmem %s4, %s242
      $region28: #{strided_eff_dwise.3} parent=11 // pred_fallthru
        _
      // Predicated region
      $region29: #{strided_eff_dwise.3} parent=11 // pred_check
        %p244 = pneg %p177
      $region30: #{strided_eff_dwise.3} parent=11 // pred_check_branch
        %246 = sbr.rel (%p244) target = $region32
      $region31: #{strided_eff_dwise.3} parent=11 // pred_region
        %p247 = scmp.lt.s32.totalorder %s22, 0
        %s248 = scalar_select %p247, %s22, 0
        %s249 = smul.addr %s248, 4
        %s250 = scalar_lea.vmem %s5, %s249
      $region32: #{strided_eff_dwise.3} parent=11 // pred_fallthru
        _
    $region12: #{strided_eff_dwise.3} parent=5 // pred_fallthru
      _
    %p251 = scmp.lt.s32.totalorder %s12, 2
    // Predicated region
    $region33: #{strided_eff_dwise.3} parent=5 // pred_check
      %p252 = pneg %p251
    $region34: #{strided_eff_dwise.3} parent=5 // pred_check_branch
      %254 = sbr.rel (%p252) target = $region36
    $region35: #{strided_eff_dwise.3} parent=5 // pred_region
      // Predicated region
      $region37: #{strided_eff_dwise.3} parent=35 // pred_check
        %p255 = pneg %p67
      $region38: #{strided_eff_dwise.3} parent=35 // pred_check_branch
        %257 = sbr.rel (%p255) target = $region40
      $region39: #{strided_eff_dwise.3} parent=35 // pred_region
        %p258 = scmp.lt.s32.totalorder %s19, 1
        %s259 = scalar_select %p258, %s19, 1
        %p260 = scmp.lt.s32.totalorder %s20, 0
        %s261 = scalar_select %p260, %s20, 0
        %s262 = smul.addr %s259, 4
        %s263 = sadd.s32 %s261, %s262
        %s264 = smul.addr %s263, 4
        %s265 = scalar_lea.vmem %s1, %s264
      $region40: #{strided_eff_dwise.3} parent=35 // pred_fallthru
        _
    $region36: #{strided_eff_dwise.3} parent=5 // pred_fallthru
      _
    %p266 = scmp.le.s32.totalorder 1, %s12
    %p267 = scmp.lt.s32.totalorder %s12, 3
    %p268 = pnand %p266, %p267
    %p269 = pneg %p268
    // Predicated region
    $region41: #{strided_eff_dwise.3} parent=5 // pred_check
      _
    $region42: #{strided_eff_dwise.3} parent=5 // pred_check_branch
      %271 = sbr.rel (%p268) target = $region44
    $region43: #{strided_eff_dwise.3} parent=5 // pred_region
      %s272 = ssub.s32 %s12, 1
      %p273 = pneg %p45
      %p274 = pneg %p42
      %p275 = scmp.lt.s32.totalorder %s21, 1
      %s276 = scalar_select %p275, %s21, 1
      %p277 = scmp.lt.s32.totalorder %s22, 0
      %s278 = scalar_select %p277, %s22, 0
      %s279 = smul.addr %s276, 4
      %s280 = sadd.s32 %s278, %s279
      %s281 = smul.addr %s280, 4
      %s282 = scalar_lea.vmem %s1, %s281
      %p283 = pneg %p73
      %p284 = pneg %p70
      %p285 = scmp.lt.s32.totalorder %s22, 0
      %s286 = scalar_select %p285, %s22, 0
      %s287 = smul.addr %s286, 4
      %s288 = scalar_lea.vmem %s2, %s287
      %p289 = pneg %p99
      %p290 = pneg %p96
      %p291 = scmp.lt.s32.totalorder %s22, 0
      %s292 = scalar_select %p291, %s22, 0
      %s293 = smul.addr %s292, 4
      %s294 = scalar_lea.vmem %s3, %s293
      %p295 = pneg %p125
      %p296 = pneg %p122
      %p297 = scmp.lt.s32.totalorder %s22, 0
      %s298 = scalar_select %p297, %s22, 0
      %s299 = smul.addr %s298, 4
      %s300 = scalar_lea.vmem %s4, %s299
      %p301 = pneg %p151
      %p302 = pneg %p148
      %p303 = scmp.lt.s32.totalorder %s22, 0
      %s304 = scalar_select %p303, %s22, 0
      %s305 = smul.addr %s304, 4
      %s306 = scalar_lea.vmem %s5, %s305
      %p307 = pneg %p177
      %p308 = pneg %p174
      %p309 = pneg %p205
      %p310 = pneg %p202
      %p311 = scmp.lt.s32.totalorder %s21, 1
      %s312 = scalar_select %p311, %s21, 1
      %p313 = scmp.lt.s32.totalorder %s22, 0
      %s314 = scalar_select %p313, %s22, 0
      %s315 = sadd.s32 %s314, %s312
      %s316 = smul.addr %s315, 4
      %s317 = scalar_lea.vmem %s6, %s316
      %p318 = scmp.lt.s32.totalorder %s21, 1
      %s319 = scalar_select %p318, %s21, 1
      %p320 = scmp.lt.s32.totalorder %s22, 0
      %s321 = scalar_select %p320, %s22, 0
      %s322 = smul.addr %s319, 4
      %s323 = sadd.s32 %s321, %s322
      %s324 = smul.addr %s323, 4
      %s325 = scalar_lea.vmem %s1, %s324
      %p326 = scmp.lt.s32.totalorder %s22, 0
      %s327 = scalar_select %p326, %s22, 0
      %s328 = smul.addr %s327, 4
      %s329 = scalar_lea.vmem %s2, %s328
      %p330 = scmp.lt.s32.totalorder %s22, 0
      %s331 = scalar_select %p330, %s22, 0
      %s332 = smul.addr %s331, 4
      %s333 = scalar_lea.vmem %s3, %s332
      %p334 = scmp.lt.s32.totalorder %s22, 0
      %s335 = scalar_select %p334, %s22, 0
      %s336 = smul.addr %s335, 4
      %s337 = scalar_lea.vmem %s4, %s336
      %p338 = scmp.lt.s32.totalorder %s22, 0
      %s339 = scalar_select %p338, %s22, 0
      %s340 = smul.addr %s339, 4
      %s341 = scalar_lea.vmem %s5, %s340
      %p342 = scmp.lt.s32.totalorder %s21, 1
      %s343 = scalar_select %p342, %s21, 1
      %p344 = scmp.lt.s32.totalorder %s22, 0
      %s345 = scalar_select %p344, %s22, 0
      %s346 = sadd.s32 %s345, %s343
      %s347 = smul.addr %s346, 4
      %s348 = scalar_lea.vmem %s6, %s347
      %v349 = vld [vmem:[%s0] sm:$0x3]
      %vm350 = vcmp.ge.s32.totalorder %v349, 1
      %v351 = vld [vmem:[%s325] sm:$0xf]
      %s352 = scalar_lea.vmem %s325, 4
      %v353 = vld [vmem:[%s352] sm:$0xf]
      %s354 = scalar_lea.vmem %s325, 8
      %v355 = vld [vmem:[%s354] sm:$0xf]
      %s356 = scalar_lea.vmem %s325, 12
      %v357 = vld [vmem:[%s356] sm:$0xf]
      %s358 = scalar_lea.vmem %s329, 16
      %v359 = vld [vmem:[%s358] sm:$0xf]
      %361 = vset.pattern.permute.xlu0 0
      %362 = vperm.xlu0 %361, %v359
      %v363 = vpop.permute.xlu0 %362
      %v365 = vmul.f32 %v351, %v363
      %s366 = scalar_lea.vmem %s329, 20
      %v367 = vld [vmem:[%s366] sm:$0xf]
      %369 = vset.pattern.permute.xlu0 0
      %370 = vperm.xlu0 %369, %v367
      %v371 = vpop.permute.xlu0 %370
      %v373 = vmul.f32 %v353, %v371
      %v374 = vadd.f32 %v365, %v373
      %vm375 = vcmask 1048064
      %376 = vrot.lane.b32.xlu0 %v353, 64
      %v377 = vpop.permute.xlu0 %376
      %v378 = vsel %vm375, %v377, %v353
      %379 = vrot.lane.b32.xlu0 %v378, 64
      %v380 = vpop.permute.xlu0 %379
      %v381 = vsel %vm375, %v380, %v353
      %v382 = vsel %vm350, 1, 0
      %v383 = vlaneseq
      %v384 = vshrl.u32 %v383, 7
      %v385 = vsub.s32 1, %v384
      %v386 = vrot.slane %v382, %v385
      %vm387 = vcmp.eq.s32.totalorder %v386, 1
      %389 = vrot.lane.b32.xlu0 %v381, 65
      %v390 = vpop.permute.xlu0 %389
      %v392 = vsel %vm387, %v390, 0.0
      %s393 = scalar_lea.vmem %s329, 12
      %v394 = vld [vmem:[%s393] sm:$0xf]
      %396 = vset.pattern.permute.xlu0 0
      %397 = vperm.xlu0 %396, %v394
      %v398 = vpop.permute.xlu0 %397
      %v400 = vmul.f32 %v392, %v398
      %v401 = vadd.f32 %v374, %v400
      %s402 = scalar_lea.vmem %s329, 28
      %v403 = vld [vmem:[%s402] sm:$0xf]
      %405 = vset.pattern.permute.xlu0 0
      %406 = vperm.xlu0 %405, %v403
      %v407 = vpop.permute.xlu0 %406
      %v409 = vmul.f32 %v355, %v407
      %v410 = vadd.f32 %v401, %v409
      %411 = vrot.lane.b32.xlu0 %v355, 64
      %v412 = vpop.permute.xlu0 %411
      %v413 = vsel %vm375, %v412, %v355
      %414 = vrot.lane.b32.xlu0 %v413, 64
      %v415 = vpop.permute.xlu0 %414
      %v416 = vsel %vm375, %v415, %v355
      %v417 = vlaneseq
      %v418 = vshrl.u32 %v417, 7
      %v419 = vsub.s32 0, %v418
      %v420 = vrot.slane %v382, %v419
      %vm421 = vcmp.eq.s32.totalorder %v420, 1
      %423 = vrot.lane.b32.xlu0 %v416, 72
      %v424 = vpop.permute.xlu0 %423
      %v426 = vsel %vm421, %v424, 0.0
      %s427 = scalar_lea.vmem %s329, 4
      %v428 = vld [vmem:[%s427] sm:$0xf]
      %430 = vset.pattern.permute.xlu0 0
      %431 = vperm.xlu0 %430, %v428
      %v432 = vpop.permute.xlu0 %431
      %v434 = vmul.f32 %v426, %v432
      %v435 = vadd.f32 %v410, %v434
      %s436 = scalar_lea.vmem %s329, 32
      %v437 = vld [vmem:[%s436] sm:$0xf]
      %439 = vset.pattern.permute.xlu0 0
      %440 = vperm.xlu0 %439, %v437
      %v441 = vpop.permute.xlu0 %440
      %v443 = vmul.f32 %v357, %v441
      %v444 = vadd.f32 %v435, %v443
      %445 = vrot.lane.b32.xlu0 %v357, 64
      %v446 = vpop.permute.xlu0 %445
      %v447 = vsel %vm375, %v446, %v357
      %448 = vrot.lane.b32.xlu0 %v447, 64
      %v449 = vpop.permute.xlu0 %448
      %v450 = vsel %vm375, %v449, %v357
      %452 = vrot.lane.b32.xlu0 %v450, 65
      %v453 = vpop.permute.xlu0 %452
      %v455 = vsel %vm387, %v453, 0.0
      %s456 = scalar_lea.vmem %s329, 24
      %v457 = vld [vmem:[%s456] sm:$0xf]
      %459 = vset.pattern.permute.xlu0 0
      %460 = vperm.xlu0 %459, %v457
      %v461 = vpop.permute.xlu0 %460
      %v463 = vmul.f32 %v455, %v461
      %v464 = vadd.f32 %v444, %v463
      %465 = vrot.lane.b32.xlu0 %v450, 72
      %v466 = vpop.permute.xlu0 %465
      %v468 = vsel %vm421, %v466, 0.0
      %s469 = scalar_lea.vmem %s329, 8
      %v470 = vld [vmem:[%s469] sm:$0xf]
      %472 = vset.pattern.permute.xlu0 0
      %473 = vperm.xlu0 %472, %v470
      %v474 = vpop.permute.xlu0 %473
      %v476 = vmul.f32 %v468, %v474
      %v477 = vadd.f32 %v464, %v476
      %v478 = vrot.slane %v382, 1
      %vm479 = vcmp.ne.s32.totalorder %v478, 0
      %vm480 = vmand %vm350, %vm479
      %v481 = vsel %vm480, 1, 0
      %v482 = vlaneseq
      %v483 = vshrl.u32 %v482, 7
      %v484 = vsub.s32 0, %v483
      %v485 = vrot.slane %v481, %v484
      %vm486 = vcmp.eq.s32.totalorder %v485, 1
      %487 = vrot.lane.b32.xlu0 %v450, 73
      %v488 = vpop.permute.xlu0 %487
      %v490 = vsel %vm486, %v488, 0.0
      %v491 = vld [vmem:[%s329] sm:$0xf]
      %493 = vset.pattern.permute.xlu0 0
      %494 = vperm.xlu0 %493, %v491
      %v495 = vpop.permute.xlu0 %494
      %v497 = vmul.f32 %v490, %v495
      %v498 = vadd.f32 %v477, %v497
      %v499 = vld [vmem:[%s333] sm:$0xf]
      %v500 = vld [vmem:[%s337] sm:$0xf]
      %v501 = vld [vmem:[%s341] sm:$0xf]
      %503 = vset.pattern.permute.xlu0 0
      %504 = vperm.xlu0 %503, %v499
      %v505 = vpop.permute.xlu0 %504
      %v507 = vmul.f32 %v498, %v505
      %509 = vset.pattern.permute.xlu0 0
      %510 = vperm.xlu0 %509, %v500
      %v511 = vpop.permute.xlu0 %510
      %v513 = vadd.f32 %v507, %v511
      %vm514 = vcmp.gt.f32.partialorder %v513, 0.0
      %516 = vset.pattern.permute.xlu0 0
      %517 = vperm.xlu0 %516, %v501
      %v518 = vpop.permute.xlu0 %517
      %v520 = vmul.f32 %v518, %v513
      %v521 = vsel %vm514, %v513, %v520
      %vm522 = vcmask 519168
      %523 = vst.msk [vmem:[%s348] sm:$0xf] %vm522, %v521
      %p524 = scmp.lt.s32.totalorder %s21, 1
      %s525 = scalar_select %p524, %s21, 1
      %p526 = scmp.lt.s32.totalorder %s22, 0
      %s527 = scalar_select %p526, %s22, 0
      %s528 = sadd.s32 %s527, %s525
      %s529 = smul.addr %s528, 4
      %s530 = scalar_lea.vmem %s6, %s529
      // Predicated region
      $region45: #{strided_eff_dwise.3} parent=43 // pred_check
        %p531 = pneg %p202
      $region46: #{strided_eff_dwise.3} parent=43 // pred_check_branch
        %533 = sbr.rel (%p531) target = $region48
      $region47: #{strided_eff_dwise.3} parent=43 // pred_region
        _
      $region48: #{strided_eff_dwise.3} parent=43 // pred_fallthru
        _
    $region44: #{strided_eff_dwise.3} parent=5 // pred_fallthru
      _
    %p534 = scmp.le.s32.totalorder 2, %s12
    // Predicated region
    $region49: #{strided_eff_dwise.3} parent=5 // pred_check
      %p535 = pneg %p534
    $region50: #{strided_eff_dwise.3} parent=5 // pred_check_branch
      %537 = sbr.rel (%p535) target = $region52
    $region51: #{strided_eff_dwise.3} parent=5 // pred_region
      %s538 = ssub.s32 %s12, 2
      // Predicated region
      $region53: #{strided_eff_dwise.3} parent=51 // pred_check
        %p539 = pneg %p208
      $region54: #{strided_eff_dwise.3} parent=51 // pred_check_branch
        %541 = sbr.rel (%p539) target = $region56
      $region55: #{strided_eff_dwise.3} parent=51 // pred_region
        %p542 = scmp.lt.s32.totalorder %s23, 1
        %s543 = scalar_select %p542, %s23, 1
        %p544 = scmp.lt.s32.totalorder %s24, 0
        %s545 = scalar_select %p544, %s24, 0
        %s546 = sadd.s32 %s545, %s543
        %s547 = smul.addr %s546, 4
        %s548 = scalar_lea.vmem %s6, %s547
      $region56: #{strided_eff_dwise.3} parent=51 // pred_fallthru
        _
    $region52: #{strided_eff_dwise.3} parent=5 // pred_fallthru
      _
  $region6: #{strided_eff_dwise.3} parent=0 // loop_footer
    %s16 = sadd.s32 1, %s12
  $region7: #{strided_eff_dwise.3} parent=0 // loop_footer_branch
    %11 = sbr.rel target = $region3
  $region8: #{strided_eff_dwise.3} parent=0 // loop_exit
    _

</llo_original>
